<compile_context>
chip_gen: v5e
topology: v5e:2x2
jax: 0.10.0
libtpu: 0.0.40
codegen_flags: <defaults>
</compile_context>

<pallas_src>
import functools

import jax
import jax.numpy as jnp
from jax import lax
from jax.experimental import pallas as pl
from jax.experimental.pallas import tpu as pltpu


def _gtb_kernel(x_ref, w_ref, w2_ref, b_ref, o_ref, heads_ref, *,
                seq_len, batch, n_features, n_heads, n_hidden, eps):
    E, H, HID = n_features, n_heads, n_hidden
    D = E // H
    B = batch
    M = seq_len * batch                      # batch folded into the row (sublane) axis

    # --- static slices into the two parameter slabs (zero-cost ref views) ---
    wcol = lambda lo, hi: w_ref[:, lo:hi]    # (E, hi-lo)
    bcol = lambda lo, hi: b_ref[:, lo:hi]    # (1, hi-lo), broadcasts over rows

    gamma = bcol(0, E)
    beta = bcol(E, 2 * E)

    def layernorm(v):
        mu = jnp.mean(v, axis=-1, keepdims=True)
        var = jnp.mean(jnp.square(v - mu), axis=-1, keepdims=True)
        return (v - mu) * lax.rsqrt(var + eps) * gamma + beta

    def gru_gate(xv, yv, wrzx, wrzy, brz, wgx, wgy):
        # r/z projections fused into one (E, 2E) matmul pair; concat([a, b]) @ W is
        # decomposed as a @ W_top + b @ W_bottom (done in the wrapper).
        rz = jax.nn.sigmoid(
            jnp.dot(xv, wrzx, preferred_element_type=jnp.float32)
            + jnp.dot(yv, wrzy, preferred_element_type=jnp.float32)
            + brz)
        r = rz[:, :E]
        z = rz[:, E:]
        h = jnp.tanh(
            jnp.dot(r * xv, wgx, preferred_element_type=jnp.float32)
            + jnp.dot(yv, wgy, preferred_element_type=jnp.float32))
        return (1.0 - z) * xv + z * h

    x = x_ref[...]                                           # (M, E)

    # ---- LayerNorm 1 + fused QKV projection (1/sqrt(D) pre-folded into Q cols) ----
    xn = layernorm(x)
    qkv = jnp.dot(xn, wcol(0, 3 * E),
                  preferred_element_type=jnp.float32) + bcol(2 * E, 5 * E)   # (M, 3E)
    q = qkv[:, :E]
    k = qkv[:, E:2 * E]
    v = qkv[:, 2 * E:]

    # ---- multi-head self-attention over the batch-folded (M, M) score matrix ----
    # Row i belongs to batch element (i % B); cross-batch scores are masked to -1e30,
    # so one (M, M) softmax per head reproduces the per-batch attention exactly.
    rb = lax.broadcasted_iota(jnp.int32, (M, M), 0) % B
    cb = lax.broadcasted_iota(jnp.int32, (M, M), 1) % B
    score_bias = jnp.where(rb == cb, 0.0, -1e30).astype(jnp.float32)         # (M, M)

    for h in range(H):
        lo, hi = h * D, (h + 1) * D
        qh = q[:, lo:hi]
        kh = k[:, lo:hi]
        vh = v[:, lo:hi]
        s = lax.dot_general(qh, kh, (((1,), (1,)), ((), ())),
                            preferred_element_type=jnp.float32) + score_bias  # (M, M)
        m = jnp.max(s, axis=-1, keepdims=True)
        e = jnp.exp(s - m)
        l = jnp.sum(e, axis=-1, keepdims=True)
        # Deferred softmax normalization: normalize the (M, D) head output, not the
        # (M, M) probabilities.
        oh = (jnp.dot(e, vh, preferred_element_type=jnp.float32)
              * pl.reciprocal(l, approx=False))
        heads_ref[:, lo:hi] = oh                  # assemble head concat in VMEM scratch

    # Single out_proj matmul over all heads (no serial per-head accumulation chain).
    attn = jnp.dot(heads_ref[...], wcol(3 * E, 4 * E),
                   preferred_element_type=jnp.float32) + bcol(5 * E, 6 * E)

    # ---- GRU gate 1 ----
    x1 = gru_gate(x, attn,
                  wcol(4 * E, 6 * E), wcol(6 * E, 8 * E), bcol(6 * E, 8 * E),
                  wcol(8 * E, 9 * E), wcol(9 * E, 10 * E))

    # ---- LayerNorm 2 (shared gamma/beta, as in the PyTorch module) + feed-forward ----
    xn2 = layernorm(x1)
    hid = jnp.maximum(
        jnp.dot(xn2, wcol(10 * E, 10 * E + HID), preferred_element_type=jnp.float32)
        + bcol(8 * E, 8 * E + HID), 0.0)
    ff = (jnp.dot(hid, w2_ref[...], preferred_element_type=jnp.float32)
          + bcol(8 * E + HID, 9 * E + HID))

    # ---- GRU gate 2 ----
    out = gru_gate(x1, ff,
                   wcol(10 * E + HID, 12 * E + HID), wcol(12 * E + HID, 14 * E + HID),
                   bcol(9 * E + HID, 11 * E + HID),
                   wcol(14 * E + HID, 15 * E + HID), wcol(15 * E + HID, 16 * E + HID))
    o_ref[...] = out.astype(o_ref.dtype)


def _fuse_gru_params(wr, wz, bz, wg, n_features):
    """Fuse r/z projections and split the concat-input weights into x/y halves."""
    E = n_features
    wrz_x = jnp.concatenate([wr[:E], wz[:E]], axis=1)             # (E, 2E)
    wrz_y = jnp.concatenate([wr[E:], wz[E:]], axis=1)             # (E, 2E)
    brz = jnp.concatenate([jnp.zeros((E,), bz.dtype), bz])        # (2E,)  (Wr has no bias)
    return wrz_x, wrz_y, brz, wg[:E], wg[E:]


def gated_transformer_block(x_sbe, params, *, n_heads, eps=1e-5):
    """x_sbe: (S, B, E) float32 -> (S, B, E) float32 (eval-mode forward)."""
    (gamma, beta, wqkv, bqkv, wo, bo,
     wr1, wz1, bz1, wg1, w1, b1, w2, b2, wr2, wz2, bz2, wg2) = params
    S, B, E = x_sbe.shape
    HID = w1.shape[1]
    D = E // n_heads
    scale = D ** -0.5

    # Fold the attention 1/sqrt(D) scale into the Q third of the fused in_proj
    # (PyTorch applies the scale after the bias, so both weight and bias are scaled).
    wqkv_s = wqkv.at[:, :E].multiply(scale)
    bqkv_s = bqkv.at[:E].multiply(scale)

    g1wrx, g1wry, g1brz, g1wgx, g1wgy = _fuse_gru_params(wr1, wz1, bz1, wg1, E)
    g2wrx, g2wry, g2brz, g2wgx, g2wgy = _fuse_gru_params(wr2, wz2, bz2, wg2, E)

    # One (E, 16E+HID) weight slab + one (1, 11E+HID) bias slab -> 4 kernel inputs
    # total instead of 21 separately double-buffered DMAs.
    w_slab = jnp.concatenate(
        [wqkv_s, wo, g1wrx, g1wry, g1wgx, g1wgy, w1,
         g2wrx, g2wry, g2wgx, g2wgy], axis=1)                      # (E, 16E + HID)
    b_slab = jnp.concatenate(
        [gamma, beta, bqkv_s, bo, g1brz, b1, b2, g2brz], axis=0)[None, :]  # (1, 11E+HID)

    M = S * B
    WTOT = 16 * E + HID
    BTOT = 11 * E + HID

    # Collapse (S, B, E) -> (S*B, E): contiguous leading-dim collapse (bitcast under
    # jit) -- no wrapper transposes, batch rides on the sublane axis.
    x2d = x_sbe.reshape(M, E)

    kernel = functools.partial(
        _gtb_kernel, seq_len=S, batch=B, n_features=E, n_heads=n_heads,
        n_hidden=HID, eps=eps)

    # Single grid step: the entire working set is a few KB, so per-step overhead would
    # dominate a multi-step grid.  (On v7x with larger batches, split the row slab into
    # 2 "parallel" steps so both TensorCores get work, and re-derive VMEM limits.)
    out2d = pl.pallas_call(
        kernel,
        out_shape=jax.ShapeDtypeStruct((M, E), jnp.float32),
        grid_spec=pltpu.PrefetchScalarGridSpec(
            num_scalar_prefetch=0,
            grid=(1,),
            in_specs=[
                pl.BlockSpec((M, E), lambda i: (0, 0)),        # x (batch folded into rows)
                pl.BlockSpec((E, WTOT), lambda i: (0, 0)),     # weight slab
                pl.BlockSpec((HID, E), lambda i: (0, 0)),      # FF w2 (HID rows, kept apart)
                pl.BlockSpec((1, BTOT), lambda i: (0, 0)),     # bias slab
            ],
            out_specs=pl.BlockSpec((M, E), lambda i: (0, 0)),
            scratch_shapes=[pltpu.VMEM((M, E), jnp.float32)],  # head-concat buffer
        ),
        compiler_params=pltpu.CompilerParams(
            dimension_semantics=("arbitrary",)),
    )(x2d, w_slab, w2, b_slab)

    return out2d.reshape(S, B, E)


def _reference(x_sbe, params, *, n_heads, eps=1e-5):
    """Plain-JAX reference matching the PyTorch forward (eval mode, mask=None)."""
    (gamma, beta, wqkv, bqkv, wo, bo,
     wr1, wz1, bz1, wg1, w1, b1, w2, b2, wr2, wz2, bz2, wg2) = params
    S, B, E = x_sbe.shape
    D = E // n_heads

    def ln(v):
        mu = jnp.mean(v, -1, keepdims=True)
        var = jnp.mean((v - mu) ** 2, -1, keepdims=True)
        return (v - mu) / jnp.sqrt(var + eps) * gamma + beta

    def gru(xv, yv, wr, wz, bz, wg):
        xy = jnp.concatenate([xv, yv], axis=-1)
        r = jax.nn.sigmoid(xy @ wr)
        z = jax.nn.sigmoid(xy @ wz + bz)
        h = jnp.tanh(jnp.concatenate([r * xv, yv], axis=-1) @ wg)
        return (1.0 - z) * xv + z * h

    xn = ln(x_sbe)
    qkv = xn @ wqkv + bqkv
    q = qkv[..., :E] * (D ** -0.5)
    k = qkv[..., E:2 * E]
    v = qkv[..., 2 * E:]
    qh = q.reshape(S, B, n_heads, D)
    kh = k.reshape(S, B, n_heads, D)
    vh = v.reshape(S, B, n_heads, D)
    scores = jnp.einsum('sbhd,tbhd->bhst', qh, kh)
    probs = jax.nn.softmax(scores, axis=-1)
    ao = jnp.einsum('bhst,tbhd->sbhd', probs, vh).reshape(S, B, E)
    attn = ao @ wo + bo

    x1 = gru(x_sbe, attn, wr1, wz1, bz1, wg1)
    xn2 = ln(x1)
    ff = jax.nn.relu(xn2 @ w1 + b1) @ w2 + b2
    return gru(x1, ff, wr2, wz2, bz2, wg2)


if __name__ == "__main__":
    # Small shapes consistent with the module: n_pixels=4 -> seq=16, batch=2,
    # n_features=32, n_heads=4, n_hidden=64.
    S, B, E, H, HID = 16, 2, 32, 4, 64
    f = jnp.float32

    key = jax.random.PRNGKey(0)
    ks = jax.random.split(key, 19)

    gamma = 1.0 + 0.1 * jax.random.normal(ks[0], (E,), f)
    beta = 0.1 * jax.random.normal(ks[1], (E,), f)
    wqkv = 0.2 * jax.random.normal(ks[2], (E, 3 * E), f)     # in_proj_weight.T
    bqkv = 0.1 * jax.random.normal(ks[3], (3 * E,), f)
    wo = 0.2 * jax.random.normal(ks[4], (E, E), f)           # out_proj.weight.T
    bo = 0.1 * jax.random.normal(ks[5], (E,), f)
    wr1 = 0.2 * jax.random.normal(ks[6], (2 * E, E), f)      # GRU1 Wr.weight.T (no bias)
    wz1 = 0.2 * jax.random.normal(ks[7], (2 * E, E), f)      # GRU1 Wz.weight.T
    bz1 = 0.1 * jax.random.normal(ks[8], (E,), f)
    wg1 = 0.2 * jax.random.normal(ks[9], (2 * E, E), f)      # GRU1 Wg.weight.T (no bias)
    w1 = 0.2 * jax.random.normal(ks[10], (E, HID), f)
    b1 = 0.1 * jax.random.normal(ks[11], (HID,), f)
    w2 = 0.2 * jax.random.normal(ks[12], (HID, E), f)
    b2 = 0.1 * jax.random.normal(ks[13], (E,), f)
    wr2 = 0.2 * jax.random.normal(ks[14], (2 * E, E), f)
    wz2 = 0.2 * jax.random.normal(ks[15], (2 * E, E), f)
    bz2 = 0.1 * jax.random.normal(ks[16], (E,), f)
    wg2 = 0.2 * jax.random.normal(ks[17], (2 * E, E), f)

    params = (gamma, beta, wqkv, bqkv, wo, bo,
              wr1, wz1, bz1, wg1, w1, b1, w2, b2, wr2, wz2, bz2, wg2)

    x = jax.random.normal(ks[18], (S, B, E), f)

    gtb = jax.jit(functools.partial(gated_transformer_block, n_heads=H))
    out = gtb(x, params)
    out = jax.block_until_ready(out)

    ref = _reference(x, params, n_heads=H)
    assert out.shape == (S, B, E)
    assert jnp.allclose(out, ref, atol=1e-4, rtol=1e-4), \
        f"max abs err = {jnp.max(jnp.abs(out - ref))}"

    print("KERNEL_OK")
</pallas_src>

<mosaic_0001>
module attributes {stable_mosaic.version = 11 : i64} {
  func.func @_gtb_kernel(%arg0: i32, %arg1: memref<32x32xf32, #tpu.memory_space<vmem>>, %arg2: memref<32x576xf32, #tpu.memory_space<vmem>>, %arg3: memref<64x32xf32, #tpu.memory_space<vmem>>, %arg4: memref<1x416xf32, #tpu.memory_space<vmem>>, %arg5: memref<32x32xf32, #tpu.memory_space<vmem>>, %arg6: memref<32x32xf32, #tpu.memory_space<vmem>>) attributes {dimension_semantics = [#tpu.dimension_semantics<arbitrary>], iteration_bounds = array<i64: 1>, scalar_prefetch = 0 : i64, scratch_operands = 1 : i64, tpu.core_type = #tpu.core_type<tc>, window_params = [{pipeline_mode = #tpu.pipeline_mode<synchronous>, transform_indices = @transform_0, window_bounds = array<i64: 32, 32>}, {pipeline_mode = #tpu.pipeline_mode<synchronous>, transform_indices = @transform_1, window_bounds = array<i64: 32, 576>}, {pipeline_mode = #tpu.pipeline_mode<synchronous>, transform_indices = @transform_2, window_bounds = array<i64: 64, 32>}, {pipeline_mode = #tpu.pipeline_mode<synchronous>, transform_indices = @transform_3, window_bounds = array<i64: 1, 416>}, {pipeline_mode = #tpu.pipeline_mode<synchronous>, transform_indices = @transform_4, window_bounds = array<i64: 32, 32>}]} {
    %c0 = arith.constant 0 : index
    %c0_0 = arith.constant 0 : index
    %0 = vector.load %arg4[%c0, %c0_0] : memref<1x416xf32, #tpu.memory_space<vmem>>, vector<1x32xf32>
    %c0_1 = arith.constant 0 : index
    %c32 = arith.constant 32 : index
    %1 = vector.load %arg4[%c0_1, %c32] : memref<1x416xf32, #tpu.memory_space<vmem>>, vector<1x32xf32>
    %c0_2 = arith.constant 0 : index
    %c0_3 = arith.constant 0 : index
    %2 = vector.load %arg1[%c0_2, %c0_3] : memref<32x32xf32, #tpu.memory_space<vmem>>, vector<32x32xf32>
    %cst = arith.constant dense<0.000000e+00> : vector<32xf32>
    %3 = vector.multi_reduction <add>, %2, %cst [1] : vector<32x32xf32> to vector<32xf32>
    %4 = vector.shape_cast %3 : vector<32xf32> to vector<32x1xf32>
    %cst_4 = arith.constant 3.200000e+01 : f32
    %5 = vector.broadcast %cst_4 : f32 to vector<32x1xf32>
    %6 = arith.divf %4, %5 : vector<32x1xf32>
    %7 = vector.broadcast %6 : vector<32x1xf32> to vector<32x32xf32>
    %8 = arith.subf %2, %7 : vector<32x32xf32>
    %9 = arith.mulf %8, %8 : vector<32x32xf32>
    %cst_5 = arith.constant dense<0.000000e+00> : vector<32xf32>
    %10 = vector.multi_reduction <add>, %9, %cst_5 [1] : vector<32x32xf32> to vector<32xf32>
    %11 = vector.shape_cast %10 : vector<32xf32> to vector<32x1xf32>
    %cst_6 = arith.constant 3.200000e+01 : f32
    %12 = vector.broadcast %cst_6 : f32 to vector<32x1xf32>
    %13 = arith.divf %11, %12 : vector<32x1xf32>
    %14 = vector.broadcast %6 : vector<32x1xf32> to vector<32x32xf32>
    %15 = arith.subf %2, %14 : vector<32x32xf32>
    %cst_7 = arith.constant 9.99999974E-6 : f32
    %16 = vector.broadcast %cst_7 : f32 to vector<32x1xf32>
    %17 = arith.addf %13, %16 : vector<32x1xf32>
    %18 = math.rsqrt %17 : vector<32x1xf32>
    %19 = vector.broadcast %18 : vector<32x1xf32> to vector<32x32xf32>
    %20 = arith.mulf %15, %19 : vector<32x32xf32>
    %21 = vector.broadcast %0 : vector<1x32xf32> to vector<32x32xf32>
    %22 = arith.mulf %20, %21 : vector<32x32xf32>
    %23 = vector.broadcast %1 : vector<1x32xf32> to vector<32x32xf32>
    %24 = arith.addf %22, %23 : vector<32x32xf32>
    %c0_8 = arith.constant 0 : index
    %c0_9 = arith.constant 0 : index
    %25 = vector.load %arg2[%c0_8, %c0_9] : memref<32x576xf32, #tpu.memory_space<vmem>>, vector<32x96xf32>
    %cst_10 = arith.constant dense<0.000000e+00> : vector<32x96xf32>
    %26 = tpu.matmul %24, %25, %cst_10 {dimension_numbers = #tpu.dot_dimension_numbers<[1], [0], [0], [1], [0, 0, 1, 1], [], []>} : vector<32x32xf32>, vector<32x96xf32>, vector<32x96xf32> -> vector<32x96xf32>
    %c0_11 = arith.constant 0 : index
    %c64 = arith.constant 64 : index
    %27 = vector.load %arg4[%c0_11, %c64] : memref<1x416xf32, #tpu.memory_space<vmem>>, vector<1x96xf32>
    %28 = vector.broadcast %27 : vector<1x96xf32> to vector<32x96xf32>
    %29 = arith.addf %26, %28 : vector<32x96xf32>
    %30 = vector.extract_strided_slice %29 {offsets = [0, 0], sizes = [32, 32], strides = [1, 1]} : vector<32x96xf32> to vector<32x32xf32>
    %31 = vector.extract_strided_slice %29 {offsets = [0, 32], sizes = [32, 32], strides = [1, 1]} : vector<32x96xf32> to vector<32x32xf32>
    %32 = vector.extract_strided_slice %29 {offsets = [0, 64], sizes = [32, 32], strides = [1, 1]} : vector<32x96xf32> to vector<32x32xf32>
    %33 = tpu.iota {dimensions = array<i32: 0>} : vector<32x32xi32>
    %c2_i32 = arith.constant 2 : i32
    %c0_i32 = arith.constant 0 : i32
    %34 = arith.cmpi eq, %c2_i32, %c0_i32 : i32
    %c1_i32 = arith.constant 1 : i32
    %35 = arith.select %34, %c1_i32, %c2_i32 : i32
    %36 = vector.broadcast %35 : i32 to vector<32x32xi32>
    %37 = arith.remsi %33, %36 : vector<32x32xi32>
    %c0_i32_12 = arith.constant 0 : i32
    %38 = vector.broadcast %c0_i32_12 : i32 to vector<32x32xi32>
    %39 = arith.cmpi ne, %37, %38 : vector<32x32xi32>
    %c0_i32_13 = arith.constant 0 : i32
    %40 = vector.broadcast %c0_i32_13 : i32 to vector<32x32xi32>
    %41 = arith.cmpi slt, %37, %40 : vector<32x32xi32>
    %c0_i32_14 = arith.constant 0 : i32
    %42 = arith.cmpi slt, %35, %c0_i32_14 : i32
    %43 = vector.broadcast %42 : i1 to vector<32x32xi1>
    %44 = vector.broadcast %43 : vector<32x32xi1> to vector<32x32xi1>
    %45 = arith.xori %41, %44 : vector<32x32xi1>
    %46 = arith.andi %45, %39 : vector<32x32xi1>
    %47 = vector.broadcast %35 : i32 to vector<32x32xi32>
    %48 = arith.addi %37, %47 : vector<32x32xi32>
    %49 = arith.select %46, %48, %37 : vector<32x32xi1>, vector<32x32xi32>
    %50 = tpu.iota {dimensions = array<i32: 1>} : vector<32x32xi32>
    %c2_i32_15 = arith.constant 2 : i32
    %c0_i32_16 = arith.constant 0 : i32
    %51 = arith.cmpi eq, %c2_i32_15, %c0_i32_16 : i32
    %c1_i32_17 = arith.constant 1 : i32
    %52 = arith.select %51, %c1_i32_17, %c2_i32_15 : i32
    %53 = vector.broadcast %52 : i32 to vector<32x32xi32>
    %54 = arith.remsi %50, %53 : vector<32x32xi32>
    %c0_i32_18 = arith.constant 0 : i32
    %55 = vector.broadcast %c0_i32_18 : i32 to vector<32x32xi32>
    %56 = arith.cmpi ne, %54, %55 : vector<32x32xi32>
    %c0_i32_19 = arith.constant 0 : i32
    %57 = vector.broadcast %c0_i32_19 : i32 to vector<32x32xi32>
    %58 = arith.cmpi slt, %54, %57 : vector<32x32xi32>
    %c0_i32_20 = arith.constant 0 : i32
    %59 = arith.cmpi slt, %52, %c0_i32_20 : i32
    %60 = vector.broadcast %59 : i1 to vector<32x32xi1>
    %61 = vector.broadcast %60 : vector<32x32xi1> to vector<32x32xi1>
    %62 = arith.xori %58, %61 : vector<32x32xi1>
    %63 = arith.andi %62, %56 : vector<32x32xi1>
    %64 = vector.broadcast %52 : i32 to vector<32x32xi32>
    %65 = arith.addi %54, %64 : vector<32x32xi32>
    %66 = arith.select %63, %65, %54 : vector<32x32xi1>, vector<32x32xi32>
    %67 = arith.cmpi eq, %49, %66 : vector<32x32xi32>
    %cst_21 = arith.constant 0.000000e+00 : f32
    %cst_22 = arith.constant -1.000000e+30 : f32
    %68 = vector.broadcast %cst_21 : f32 to vector<32x32xf32>
    %69 = vector.broadcast %cst_22 : f32 to vector<32x32xf32>
    %70 = arith.select %67, %68, %69 : vector<32x32xi1>, vector<32x32xf32>
    %71 = vector.extract_strided_slice %30 {offsets = [0, 0], sizes = [32, 8], strides = [1, 1]} : vector<32x32xf32> to vector<32x8xf32>
    %72 = vector.extract_strided_slice %31 {offsets = [0, 0], sizes = [32, 8], strides = [1, 1]} : vector<32x32xf32> to vector<32x8xf32>
    %73 = vector.extract_strided_slice %32 {offsets = [0, 0], sizes = [32, 8], strides = [1, 1]} : vector<32x32xf32> to vector<32x8xf32>
    %cst_23 = arith.constant dense<0.000000e+00> : vector<32x32xf32>
    %74 = tpu.matmul %71, %72, %cst_23 {dimension_numbers = #tpu.dot_dimension_numbers<[1], [1], [0], [0], [0, 0, 1, 0], [], []>} : vector<32x8xf32>, vector<32x8xf32>, vector<32x32xf32> -> vector<32x32xf32>
    %75 = arith.addf %74, %70 : vector<32x32xf32>
    %cst_24 = arith.constant dense<0xFF800000> : vector<32xf32>
    %76 = vector.multi_reduction <maximumf>, %75, %cst_24 [1] : vector<32x32xf32> to vector<32xf32>
    %77 = vector.shape_cast %76 : vector<32xf32> to vector<32x1xf32>
    %78 = vector.broadcast %77 : vector<32x1xf32> to vector<32x32xf32>
    %79 = arith.subf %75, %78 : vector<32x32xf32>
    %80 = math.exp %79 : vector<32x32xf32>
    %cst_25 = arith.constant dense<0.000000e+00> : vector<32xf32>
    %81 = vector.multi_reduction <add>, %80, %cst_25 [1] : vector<32x32xf32> to vector<32xf32>
    %82 = vector.shape_cast %81 : vector<32xf32> to vector<32x1xf32>
    %cst_26 = arith.constant dense<0.000000e+00> : vector<32x8xf32>
    %83 = tpu.matmul %80, %73, %cst_26 {dimension_numbers = #tpu.dot_dimension_numbers<[1], [0], [0], [1], [0, 0, 1, 1], [], []>} : vector<32x32xf32>, vector<32x8xf32>, vector<32x8xf32> -> vector<32x8xf32>
    %84 = tpu.reciprocal %82 : vector<32x1xf32> -> vector<32x1xf32>
    %85 = vector.broadcast %84 : vector<32x1xf32> to vector<32x8xf32>
    %86 = arith.mulf %83, %85 : vector<32x8xf32>
    %c0_27 = arith.constant 0 : index
    %c0_28 = arith.constant 0 : index
    %87 = vector.load %arg6[%c0_27, %c0_28] : memref<32x32xf32, #tpu.memory_space<vmem>>, vector<32x8xf32>
    tpu.vector_store %arg6[%c0_27, %c0_28], %86 {strides = array<i32>} : memref<32x32xf32, #tpu.memory_space<vmem>>, vector<32x8xf32>,
    %88 = vector.extract_strided_slice %30 {offsets = [0, 8], sizes = [32, 8], strides = [1, 1]} : vector<32x32xf32> to vector<32x8xf32>
    %89 = vector.extract_strided_slice %31 {offsets = [0, 8], sizes = [32, 8], strides = [1, 1]} : vector<32x32xf32> to vector<32x8xf32>
    %90 = vector.extract_strided_slice %32 {offsets = [0, 8], sizes = [32, 8], strides = [1, 1]} : vector<32x32xf32> to vector<32x8xf32>
    %cst_29 = arith.constant dense<0.000000e+00> : vector<32x32xf32>
    %91 = tpu.matmul %88, %89, %cst_29 {dimension_numbers = #tpu.dot_dimension_numbers<[1], [1], [0], [0], [0, 0, 1, 0], [], []>} : vector<32x8xf32>, vector<32x8xf32>, vector<32x32xf32> -> vector<32x32xf32>
    %92 = arith.addf %91, %70 : vector<32x32xf32>
    %cst_30 = arith.constant dense<0xFF800000> : vector<32xf32>
    %93 = vector.multi_reduction <maximumf>, %92, %cst_30 [1] : vector<32x32xf32> to vector<32xf32>
    %94 = vector.shape_cast %93 : vector<32xf32> to vector<32x1xf32>
    %95 = vector.broadcast %94 : vector<32x1xf32> to vector<32x32xf32>
    %96 = arith.subf %92, %95 : vector<32x32xf32>
    %97 = math.exp %96 : vector<32x32xf32>
    %cst_31 = arith.constant dense<0.000000e+00> : vector<32xf32>
    %98 = vector.multi_reduction <add>, %97, %cst_31 [1] : vector<32x32xf32> to vector<32xf32>
    %99 = vector.shape_cast %98 : vector<32xf32> to vector<32x1xf32>
    %cst_32 = arith.constant dense<0.000000e+00> : vector<32x8xf32>
    %100 = tpu.matmul %97, %90, %cst_32 {dimension_numbers = #tpu.dot_dimension_numbers<[1], [0], [0], [1], [0, 0, 1, 1], [], []>} : vector<32x32xf32>, vector<32x8xf32>, vector<32x8xf32> -> vector<32x8xf32>
    %101 = tpu.reciprocal %99 : vector<32x1xf32> -> vector<32x1xf32>
    %102 = vector.broadcast %101 : vector<32x1xf32> to vector<32x8xf32>
    %103 = arith.mulf %100, %102 : vector<32x8xf32>
    %c0_33 = arith.constant 0 : index
    %c8 = arith.constant 8 : index
    %104 = vector.load %arg6[%c0_33, %c8] : memref<32x32xf32, #tpu.memory_space<vmem>>, vector<32x8xf32>
    tpu.vector_store %arg6[%c0_33, %c8], %103 {strides = array<i32>} : memref<32x32xf32, #tpu.memory_space<vmem>>, vector<32x8xf32>,
    %105 = vector.extract_strided_slice %30 {offsets = [0, 16], sizes = [32, 8], strides = [1, 1]} : vector<32x32xf32> to vector<32x8xf32>
    %106 = vector.extract_strided_slice %31 {offsets = [0, 16], sizes = [32, 8], strides = [1, 1]} : vector<32x32xf32> to vector<32x8xf32>
    %107 = vector.extract_strided_slice %32 {offsets = [0, 16], sizes = [32, 8], strides = [1, 1]} : vector<32x32xf32> to vector<32x8xf32>
    %cst_34 = arith.constant dense<0.000000e+00> : vector<32x32xf32>
    %108 = tpu.matmul %105, %106, %cst_34 {dimension_numbers = #tpu.dot_dimension_numbers<[1], [1], [0], [0], [0, 0, 1, 0], [], []>} : vector<32x8xf32>, vector<32x8xf32>, vector<32x32xf32> -> vector<32x32xf32>
    %109 = arith.addf %108, %70 : vector<32x32xf32>
    %cst_35 = arith.constant dense<0xFF800000> : vector<32xf32>
    %110 = vector.multi_reduction <maximumf>, %109, %cst_35 [1] : vector<32x32xf32> to vector<32xf32>
    %111 = vector.shape_cast %110 : vector<32xf32> to vector<32x1xf32>
    %112 = vector.broadcast %111 : vector<32x1xf32> to vector<32x32xf32>
    %113 = arith.subf %109, %112 : vector<32x32xf32>
    %114 = math.exp %113 : vector<32x32xf32>
    %cst_36 = arith.constant dense<0.000000e+00> : vector<32xf32>
    %115 = vector.multi_reduction <add>, %114, %cst_36 [1] : vector<32x32xf32> to vector<32xf32>
    %116 = vector.shape_cast %115 : vector<32xf32> to vector<32x1xf32>
    %cst_37 = arith.constant dense<0.000000e+00> : vector<32x8xf32>
    %117 = tpu.matmul %114, %107, %cst_37 {dimension_numbers = #tpu.dot_dimension_numbers<[1], [0], [0], [1], [0, 0, 1, 1], [], []>} : vector<32x32xf32>, vector<32x8xf32>, vector<32x8xf32> -> vector<32x8xf32>
    %118 = tpu.reciprocal %116 : vector<32x1xf32> -> vector<32x1xf32>
    %119 = vector.broadcast %118 : vector<32x1xf32> to vector<32x8xf32>
    %120 = arith.mulf %117, %119 : vector<32x8xf32>
    %c0_38 = arith.constant 0 : index
    %c16 = arith.constant 16 : index
    %121 = vector.load %arg6[%c0_38, %c16] : memref<32x32xf32, #tpu.memory_space<vmem>>, vector<32x8xf32>
    tpu.vector_store %arg6[%c0_38, %c16], %120 {strides = array<i32>} : memref<32x32xf32, #tpu.memory_space<vmem>>, vector<32x8xf32>,
    %122 = vector.extract_strided_slice %30 {offsets = [0, 24], sizes = [32, 8], strides = [1, 1]} : vector<32x32xf32> to vector<32x8xf32>
    %123 = vector.extract_strided_slice %31 {offsets = [0, 24], sizes = [32, 8], strides = [1, 1]} : vector<32x32xf32> to vector<32x8xf32>
    %124 = vector.extract_strided_slice %32 {offsets = [0, 24], sizes = [32, 8], strides = [1, 1]} : vector<32x32xf32> to vector<32x8xf32>
    %cst_39 = arith.constant dense<0.000000e+00> : vector<32x32xf32>
    %125 = tpu.matmul %122, %123, %cst_39 {dimension_numbers = #tpu.dot_dimension_numbers<[1], [1], [0], [0], [0, 0, 1, 0], [], []>} : vector<32x8xf32>, vector<32x8xf32>, vector<32x32xf32> -> vector<32x32xf32>
    %126 = arith.addf %125, %70 : vector<32x32xf32>
    %cst_40 = arith.constant dense<0xFF800000> : vector<32xf32>
    %127 = vector.multi_reduction <maximumf>, %126, %cst_40 [1] : vector<32x32xf32> to vector<32xf32>
    %128 = vector.shape_cast %127 : vector<32xf32> to vector<32x1xf32>
    %129 = vector.broadcast %128 : vector<32x1xf32> to vector<32x32xf32>
    %130 = arith.subf %126, %129 : vector<32x32xf32>
    %131 = math.exp %130 : vector<32x32xf32>
    %cst_41 = arith.constant dense<0.000000e+00> : vector<32xf32>
    %132 = vector.multi_reduction <add>, %131, %cst_41 [1] : vector<32x32xf32> to vector<32xf32>
    %133 = vector.shape_cast %132 : vector<32xf32> to vector<32x1xf32>
    %cst_42 = arith.constant dense<0.000000e+00> : vector<32x8xf32>
    %134 = tpu.matmul %131, %124, %cst_42 {dimension_numbers = #tpu.dot_dimension_numbers<[1], [0], [0], [1], [0, 0, 1, 1], [], []>} : vector<32x32xf32>, vector<32x8xf32>, vector<32x8xf32> -> vector<32x8xf32>
    %135 = tpu.reciprocal %133 : vector<32x1xf32> -> vector<32x1xf32>
    %136 = vector.broadcast %135 : vector<32x1xf32> to vector<32x8xf32>
    %137 = arith.mulf %134, %136 : vector<32x8xf32>
    %c0_43 = arith.constant 0 : index
    %c24 = arith.constant 24 : index
    %138 = vector.load %arg6[%c0_43, %c24] : memref<32x32xf32, #tpu.memory_space<vmem>>, vector<32x8xf32>
    tpu.vector_store %arg6[%c0_43, %c24], %137 {strides = array<i32>} : memref<32x32xf32, #tpu.memory_space<vmem>>, vector<32x8xf32>,
    %c0_44 = arith.constant 0 : index
    %c0_45 = arith.constant 0 : index
    %139 = vector.load %arg6[%c0_44, %c0_45] : memref<32x32xf32, #tpu.memory_space<vmem>>, vector<32x32xf32>
    %c0_46 = arith.constant 0 : index
    %c96 = arith.constant 96 : index
    %140 = vector.load %arg2[%c0_46, %c96] : memref<32x576xf32, #tpu.memory_space<vmem>>, vector<32x32xf32>
    %cst_47 = arith.constant dense<0.000000e+00> : vector<32x32xf32>
    %141 = tpu.matmul %139, %140, %cst_47 {dimension_numbers = #tpu.dot_dimension_numbers<[1], [0], [0], [1], [0, 0, 1, 1], [], []>} : vector<32x32xf32>, vector<32x32xf32>, vector<32x32xf32> -> vector<32x32xf32>
    %c0_48 = arith.constant 0 : index
    %c160 = arith.constant 160 : index
    %142 = vector.load %arg4[%c0_48, %c160] : memref<1x416xf32, #tpu.memory_space<vmem>>, vector<1x32xf32>
    %143 = vector.broadcast %142 : vector<1x32xf32> to vector<32x32xf32>
    %144 = arith.addf %141, %143 : vector<32x32xf32>
    %c0_49 = arith.constant 0 : index
    %c128 = arith.constant 128 : index
    %145 = vector.load %arg2[%c0_49, %c128] : memref<32x576xf32, #tpu.memory_space<vmem>>, vector<32x64xf32>
    %c0_50 = arith.constant 0 : index
    %c192 = arith.constant 192 : index
    %146 = vector.load %arg2[%c0_50, %c192] : memref<32x576xf32, #tpu.memory_space<vmem>>, vector<32x64xf32>
    %c0_51 = arith.constant 0 : index
    %c192_52 = arith.constant 192 : index
    %147 = vector.load %arg4[%c0_51, %c192_52] : memref<1x416xf32, #tpu.memory_space<vmem>>, vector<1x64xf32>
    %c0_53 = arith.constant 0 : index
    %c256 = arith.constant 256 : index
    %148 = vector.load %arg2[%c0_53, %c256] : memref<32x576xf32, #tpu.memory_space<vmem>>, vector<32x32xf32>
    %c0_54 = arith.constant 0 : index
    %c288 = arith.constant 288 : index
    %149 = vector.load %arg2[%c0_54, %c288] : memref<32x576xf32, #tpu.memory_space<vmem>>, vector<32x32xf32>
    %cst_55 = arith.constant dense<0.000000e+00> : vector<32x64xf32>
    %150 = tpu.matmul %2, %145, %cst_55 {dimension_numbers = #tpu.dot_dimension_numbers<[1], [0], [0], [1], [0, 0, 1, 1], [], []>} : vector<32x32xf32>, vector<32x64xf32>, vector<32x64xf32> -> vector<32x64xf32>
    %cst_56 = arith.constant dense<0.000000e+00> : vector<32x64xf32>
    %151 = tpu.matmul %144, %146, %cst_56 {dimension_numbers = #tpu.dot_dimension_numbers<[1], [0], [0], [1], [0, 0, 1, 1], [], []>} : vector<32x32xf32>, vector<32x64xf32>, vector<32x64xf32> -> vector<32x64xf32>
    %152 = arith.addf %150, %151 : vector<32x64xf32>
    %153 = vector.broadcast %147 : vector<1x64xf32> to vector<32x64xf32>
    %154 = arith.addf %152, %153 : vector<32x64xf32>
    %155 = arith.negf %154 : vector<32x64xf32>
    %156 = math.exp %155 : vector<32x64xf32>
    %cst_57 = arith.constant 1.000000e+00 : f32
    %157 = vector.broadcast %cst_57 : f32 to vector<32x64xf32>
    %158 = arith.addf %157, %156 : vector<32x64xf32>
    %159 = arith.divf %157, %158 : vector<32x64xf32>
    %160 = vector.extract_strided_slice %159 {offsets = [0, 0], sizes = [32, 32], strides = [1, 1]} : vector<32x64xf32> to vector<32x32xf32>
    %161 = vector.extract_strided_slice %159 {offsets = [0, 32], sizes = [32, 32], strides = [1, 1]} : vector<32x64xf32> to vector<32x32xf32>
    %162 = arith.mulf %160, %2 : vector<32x32xf32>
    %cst_58 = arith.constant dense<0.000000e+00> : vector<32x32xf32>
    %163 = tpu.matmul %162, %148, %cst_58 {dimension_numbers = #tpu.dot_dimension_numbers<[1], [0], [0], [1], [0, 0, 1, 1], [], []>} : vector<32x32xf32>, vector<32x32xf32>, vector<32x32xf32> -> vector<32x32xf32>
    %cst_59 = arith.constant dense<0.000000e+00> : vector<32x32xf32>
    %164 = tpu.matmul %144, %149, %cst_59 {dimension_numbers = #tpu.dot_dimension_numbers<[1], [0], [0], [1], [0, 0, 1, 1], [], []>} : vector<32x32xf32>, vector<32x32xf32>, vector<32x32xf32> -> vector<32x32xf32>
    %165 = arith.addf %163, %164 : vector<32x32xf32>
    %166 = math.tanh %165 : vector<32x32xf32>
    %cst_60 = arith.constant 1.000000e+00 : f32
    %167 = vector.broadcast %cst_60 : f32 to vector<32x32xf32>
    %168 = arith.subf %167, %161 : vector<32x32xf32>
    %169 = arith.mulf %168, %2 : vector<32x32xf32>
    %170 = arith.mulf %161, %166 : vector<32x32xf32>
    %171 = arith.addf %169, %170 : vector<32x32xf32>
    %cst_61 = arith.constant dense<0.000000e+00> : vector<32xf32>
    %172 = vector.multi_reduction <add>, %171, %cst_61 [1] : vector<32x32xf32> to vector<32xf32>
    %173 = vector.shape_cast %172 : vector<32xf32> to vector<32x1xf32>
    %cst_62 = arith.constant 3.200000e+01 : f32
    %174 = vector.broadcast %cst_62 : f32 to vector<32x1xf32>
    %175 = arith.divf %173, %174 : vector<32x1xf32>
    %176 = vector.broadcast %175 : vector<32x1xf32> to vector<32x32xf32>
    %177 = arith.subf %171, %176 : vector<32x32xf32>
    %178 = arith.mulf %177, %177 : vector<32x32xf32>
    %cst_63 = arith.constant dense<0.000000e+00> : vector<32xf32>
    %179 = vector.multi_reduction <add>, %178, %cst_63 [1] : vector<32x32xf32> to vector<32xf32>
    %180 = vector.shape_cast %179 : vector<32xf32> to vector<32x1xf32>
    %cst_64 = arith.constant 3.200000e+01 : f32
    %181 = vector.broadcast %cst_64 : f32 to vector<32x1xf32>
    %182 = arith.divf %180, %181 : vector<32x1xf32>
    %183 = vector.broadcast %175 : vector<32x1xf32> to vector<32x32xf32>
    %184 = arith.subf %171, %183 : vector<32x32xf32>
    %cst_65 = arith.constant 9.99999974E-6 : f32
    %185 = vector.broadcast %cst_65 : f32 to vector<32x1xf32>
    %186 = arith.addf %182, %185 : vector<32x1xf32>
    %187 = math.rsqrt %186 : vector<32x1xf32>
    %188 = vector.broadcast %187 : vector<32x1xf32> to vector<32x32xf32>
    %189 = arith.mulf %184, %188 : vector<32x32xf32>
    %190 = vector.broadcast %0 : vector<1x32xf32> to vector<32x32xf32>
    %191 = arith.mulf %189, %190 : vector<32x32xf32>
    %192 = vector.broadcast %1 : vector<1x32xf32> to vector<32x32xf32>
    %193 = arith.addf %191, %192 : vector<32x32xf32>
    %c0_66 = arith.constant 0 : index
    %c320 = arith.constant 320 : index
    %194 = vector.load %arg2[%c0_66, %c320] : memref<32x576xf32, #tpu.memory_space<vmem>>, vector<32x64xf32>
    %cst_67 = arith.constant dense<0.000000e+00> : vector<32x64xf32>
    %195 = tpu.matmul %193, %194, %cst_67 {dimension_numbers = #tpu.dot_dimension_numbers<[1], [0], [0], [1], [0, 0, 1, 1], [], []>} : vector<32x32xf32>, vector<32x64xf32>, vector<32x64xf32> -> vector<32x64xf32>
    %c0_68 = arith.constant 0 : index
    %c256_69 = arith.constant 256 : index
    %196 = vector.load %arg4[%c0_68, %c256_69] : memref<1x416xf32, #tpu.memory_space<vmem>>, vector<1x64xf32>
    %197 = vector.broadcast %196 : vector<1x64xf32> to vector<32x64xf32>
    %198 = arith.addf %195, %197 : vector<32x64xf32>
    %cst_70 = arith.constant 0.000000e+00 : f32
    %199 = vector.broadcast %cst_70 : f32 to vector<32x64xf32>
    %200 = arith.maximumf %198, %199 : vector<32x64xf32>
    %c0_71 = arith.constant 0 : index
    %c0_72 = arith.constant 0 : index
    %201 = vector.load %arg3[%c0_71, %c0_72] : memref<64x32xf32, #tpu.memory_space<vmem>>, vector<64x32xf32>
    %cst_73 = arith.constant dense<0.000000e+00> : vector<32x32xf32>
    %202 = tpu.matmul %200, %201, %cst_73 {dimension_numbers = #tpu.dot_dimension_numbers<[1], [0], [0], [1], [0, 0, 1, 1], [], []>} : vector<32x64xf32>, vector<64x32xf32>, vector<32x32xf32> -> vector<32x32xf32>
    %c0_74 = arith.constant 0 : index
    %c320_75 = arith.constant 320 : index
    %203 = vector.load %arg4[%c0_74, %c320_75] : memref<1x416xf32, #tpu.memory_space<vmem>>, vector<1x32xf32>
    %204 = vector.broadcast %203 : vector<1x32xf32> to vector<32x32xf32>
    %205 = arith.addf %202, %204 : vector<32x32xf32>
    %c0_76 = arith.constant 0 : index
    %c384 = arith.constant 384 : index
    %206 = vector.load %arg2[%c0_76, %c384] : memref<32x576xf32, #tpu.memory_space<vmem>>, vector<32x64xf32>
    %c0_77 = arith.constant 0 : index
    %c448 = arith.constant 448 : index
    %207 = vector.load %arg2[%c0_77, %c448] : memref<32x576xf32, #tpu.memory_space<vmem>>, vector<32x64xf32>
    %c0_78 = arith.constant 0 : index
    %c352 = arith.constant 352 : index
    %208 = vector.load %arg4[%c0_78, %c352] : memref<1x416xf32, #tpu.memory_space<vmem>>, vector<1x64xf32>
    %c0_79 = arith.constant 0 : index
    %c512 = arith.constant 512 : index
    %209 = vector.load %arg2[%c0_79, %c512] : memref<32x576xf32, #tpu.memory_space<vmem>>, vector<32x32xf32>
    %c0_80 = arith.constant 0 : index
    %c544 = arith.constant 544 : index
    %210 = vector.load %arg2[%c0_80, %c544] : memref<32x576xf32, #tpu.memory_space<vmem>>, vector<32x32xf32>
    %cst_81 = arith.constant dense<0.000000e+00> : vector<32x64xf32>
    %211 = tpu.matmul %171, %206, %cst_81 {dimension_numbers = #tpu.dot_dimension_numbers<[1], [0], [0], [1], [0, 0, 1, 1], [], []>} : vector<32x32xf32>, vector<32x64xf32>, vector<32x64xf32> -> vector<32x64xf32>
    %cst_82 = arith.constant dense<0.000000e+00> : vector<32x64xf32>
    %212 = tpu.matmul %205, %207, %cst_82 {dimension_numbers = #tpu.dot_dimension_numbers<[1], [0], [0], [1], [0, 0, 1, 1], [], []>} : vector<32x32xf32>, vector<32x64xf32>, vector<32x64xf32> -> vector<32x64xf32>
    %213 = arith.addf %211, %212 : vector<32x64xf32>
    %214 = vector.broadcast %208 : vector<1x64xf32> to vector<32x64xf32>
    %215 = arith.addf %213, %214 : vector<32x64xf32>
    %216 = arith.negf %215 : vector<32x64xf32>
    %217 = math.exp %216 : vector<32x64xf32>
    %cst_83 = arith.constant 1.000000e+00 : f32
    %218 = vector.broadcast %cst_83 : f32 to vector<32x64xf32>
    %219 = arith.addf %218, %217 : vector<32x64xf32>
    %220 = arith.divf %218, %219 : vector<32x64xf32>
    %221 = vector.extract_strided_slice %220 {offsets = [0, 0], sizes = [32, 32], strides = [1, 1]} : vector<32x64xf32> to vector<32x32xf32>
    %222 = vector.extract_strided_slice %220 {offsets = [0, 32], sizes = [32, 32], strides = [1, 1]} : vector<32x64xf32> to vector<32x32xf32>
    %223 = arith.mulf %221, %171 : vector<32x32xf32>
    %cst_84 = arith.constant dense<0.000000e+00> : vector<32x32xf32>
    %224 = tpu.matmul %223, %209, %cst_84 {dimension_numbers = #tpu.dot_dimension_numbers<[1], [0], [0], [1], [0, 0, 1, 1], [], []>} : vector<32x32xf32>, vector<32x32xf32>, vector<32x32xf32> -> vector<32x32xf32>
    %cst_85 = arith.constant dense<0.000000e+00> : vector<32x32xf32>
    %225 = tpu.matmul %205, %210, %cst_85 {dimension_numbers = #tpu.dot_dimension_numbers<[1], [0], [0], [1], [0, 0, 1, 1], [], []>} : vector<32x32xf32>, vector<32x32xf32>, vector<32x32xf32> -> vector<32x32xf32>
    %226 = arith.addf %224, %225 : vector<32x32xf32>
    %227 = math.tanh %226 : vector<32x32xf32>
    %cst_86 = arith.constant 1.000000e+00 : f32
    %228 = vector.broadcast %cst_86 : f32 to vector<32x32xf32>
    %229 = arith.subf %228, %222 : vector<32x32xf32>
    %230 = arith.mulf %229, %171 : vector<32x32xf32>
    %231 = arith.mulf %222, %227 : vector<32x32xf32>
    %232 = arith.addf %230, %231 : vector<32x32xf32>
    %c0_87 = arith.constant 0 : index
    %c0_88 = arith.constant 0 : index
    %233 = vector.load %arg5[%c0_87, %c0_88] : memref<32x32xf32, #tpu.memory_space<vmem>>, vector<32x32xf32>
    tpu.vector_store %arg5[%c0_87, %c0_88], %232 {strides = array<i32>} : memref<32x32xf32, #tpu.memory_space<vmem>>, vector<32x32xf32>,
    return
  }
  func.func @transform_0(%arg0: i32) -> (i32, i32) {
    %c0_i32 = arith.constant 0 : i32
    %c0_i32_0 = arith.constant 0 : i32
    %c0_i32_1 = arith.constant 0 : i32
    return %c0_i32, %c0_i32_0 : i32, i32
  }
  func.func @transform_1(%arg0: i32) -> (i32, i32) {
    %c0_i32 = arith.constant 0 : i32
    %c0_i32_0 = arith.constant 0 : i32
    %c0_i32_1 = arith.constant 0 : i32
    return %c0_i32, %c0_i32_0 : i32, i32
  }
  func.func @transform_2(%arg0: i32) -> (i32, i32) {
    %c0_i32 = arith.constant 0 : i32
    %c0_i32_0 = arith.constant 0 : i32
    %c0_i32_1 = arith.constant 0 : i32
    return %c0_i32, %c0_i32_0 : i32, i32
  }
  func.func @transform_3(%arg0: i32) -> (i32, i32) {
    %c0_i32 = arith.constant 0 : i32
    %c0_i32_0 = arith.constant 0 : i32
    %c0_i32_1 = arith.constant 0 : i32
    return %c0_i32, %c0_i32_0 : i32, i32
  }
  func.func @transform_4(%arg0: i32) -> (i32, i32) {
    %c0_i32 = arith.constant 0 : i32
    %c0_i32_0 = arith.constant 0 : i32
    %c0_i32_1 = arith.constant 0 : i32
    return %c0_i32, %c0_i32_0 : i32, i32
  }
}

</mosaic_0001>

<llo_original>
// kernel: gated_transformer_block.1
$region0: #{gated_transformer_block.1}
  #allocation0 [shape = 'u32[]', space=smem, size = 0x4, offset = 0x4, fixed_abs, tag = 'smem constant byte address 0x4 - core index']
  #allocation1 [shape = 'u32[72,128]{1,0:T(1,128)}', space=vmem, size = 0x9000, scoped, tag = 'internal scratch']
  #allocation2 [shape = 'f32[32,32]{1,0:T(8,128)}', space=vmem, size = 0x4000, scoped, tag = 'scratch operand']
  %s0 = inlined_call_operand.vmem [shape: f32[32,32], index: 0, kind: input, shape index: {}]
  %s1 = inlined_call_operand.vmem [shape: f32[32,576], index: 1, kind: input, shape index: {}]
  %s2 = inlined_call_operand.vmem [shape: f32[64,32], index: 2, kind: input, shape index: {}]
  %s3 = inlined_call_operand.vmem [shape: f32[1,416], index: 3, kind: input, shape index: {}]
  %s4 = inlined_call_operand.hbm [shape: f32[32,32], index: 4, kind: output, shape index: {}]
  %s5 = sld [smem:[#allocation0]]
  $region26: #{gated_transformer_block.1} parent=0
    _
  %s7 = ssub.s32 1, %s5
  %s8 = scalar_select 0, %s7, %s5
  $region1: #{gated_transformer_block.1} parent=0
    #allocation3 [shape = 'u8[16384]{0}', space=vmem, size = 0x4000, scoped, tag = 'output window, operand 0, single buffered']
    #allocation4 [shape = 's32[1]{0}', space=sflag, size = 0x4, scoped, tag = 'scoped memory for gated_transformer_block.1']
    %9 = vsyncpa [#allocation4], 0
    // Predicated region
    $region2: #{gated_transformer_block.1} parent=1 // pred_check
      _
    $region3: #{gated_transformer_block.1} parent=1 // pred_check_branch
      %11 = sbr.rel (0) target = $region5
    $region4: #{gated_transformer_block.1} parent=1 // pred_region
      _
    $region5: #{gated_transformer_block.1} parent=1 // pred_fallthru
      _
    // Predicated region
    $region6: #{gated_transformer_block.1} parent=1 // pred_check
      _
    $region7: #{gated_transformer_block.1} parent=1 // pred_check_branch
      %13 = sbr.rel (0) target = $region9
    $region8: #{gated_transformer_block.1} parent=1 // pred_region
      _
    $region9: #{gated_transformer_block.1} parent=1 // pred_fallthru
      _
    // Predicated region
    $region10: #{gated_transformer_block.1} parent=1 // pred_check
      _
    $region11: #{gated_transformer_block.1} parent=1 // pred_check_branch
      %15 = sbr.rel (0) target = $region13
    $region12: #{gated_transformer_block.1} parent=1 // pred_region
      _
    $region13: #{gated_transformer_block.1} parent=1 // pred_fallthru
      _
    // Predicated region
    $region14: #{gated_transformer_block.1} parent=1 // pred_check
      _
    $region15: #{gated_transformer_block.1} parent=1 // pred_check_branch
      %17 = sbr.rel (0) target = $region17
    $region16: #{gated_transformer_block.1} parent=1 // pred_region
      _
    $region17: #{gated_transformer_block.1} parent=1 // pred_fallthru
      _
    %v18 = vld [vmem:[%s3] sm:$0x1]
    %v19 = vld [vmem:[%s0] sm:$0xff]
    %v20 = vld [vmem:[%s0 + $0x8] sm:$0xff]
    %v21 = vld [vmem:[%s0 + $0x10] sm:$0xff]
    %v22 = vld [vmem:[%s0 + $0x18] sm:$0xff]
    %vm23 = vcmask 261120
    %v24 = vsel %vm23, %v19, 0.0
    %25 = vadd.xlane.f32.xlu0 %v24
    %v26 = vpop.xlane.xlu0 %25
    %v27 = vsel %vm23, %v20, 0.0
    %28 = vadd.xlane.f32.xlu0 %v27
    %v29 = vpop.xlane.xlu0 %28
    %v30 = vsel %vm23, %v21, 0.0
    %31 = vadd.xlane.f32.xlu0 %v30
    %v32 = vpop.xlane.xlu0 %31
    %v33 = vsel %vm23, %v22, 0.0
    %34 = vadd.xlane.f32.xlu0 %v33
    %v35 = vpop.xlane.xlu0 %34
    %v36 = vrcp.pop 32.0
    %v37 = vmul.f32 32.0, %v36
    %v38 = vsub.f32 1.0, %v37
    %v39 = vmul.f32 %v36, %v38
    %v40 = vadd.f32 %v36, %v39
    %vm41 = vweird.f32 %v36
    %v42 = vsel %vm41, %v36, %v40
    %v43 = vmul.f32 %v26, %v42
    %v44 = vmul.f32 %v29, %v42
    %v45 = vmul.f32 %v32, %v42
    %v46 = vmul.f32 %v35, %v42
    %v47 = vsub.f32 %v19, %v43
    %v48 = vsub.f32 %v20, %v44
    %v49 = vsub.f32 %v21, %v45
    %v50 = vsub.f32 %v22, %v46
    %v51 = vmul.f32 %v47, %v47
    %v52 = vmul.f32 %v48, %v48
    %v53 = vmul.f32 %v49, %v49
    %v54 = vmul.f32 %v50, %v50
    %v55 = vsel %vm23, %v51, 0.0
    %56 = vadd.xlane.f32.xlu0 %v55
    %v57 = vpop.xlane.xlu0 %56
    %v58 = vsel %vm23, %v52, 0.0
    %59 = vadd.xlane.f32.xlu0 %v58
    %v60 = vpop.xlane.xlu0 %59
    %v61 = vsel %vm23, %v53, 0.0
    %62 = vadd.xlane.f32.xlu0 %v61
    %v63 = vpop.xlane.xlu0 %62
    %v64 = vsel %vm23, %v54, 0.0
    %65 = vadd.xlane.f32.xlu0 %v64
    %v66 = vpop.xlane.xlu0 %65
    %v67 = vmul.f32 %v57, %v42
    %v68 = vmul.f32 %v60, %v42
    %v69 = vmul.f32 %v63, %v42
    %v70 = vmul.f32 %v66, %v42
    %v71 = vadd.f32 %v67, 1e-05
    %v72 = vadd.f32 %v68, 1e-05
    %v73 = vadd.f32 %v69, 1e-05
    %v74 = vadd.f32 %v70, 1e-05
    %v75 = vrsqrt.pop %v71
    %v76 = vmul.f32 %v75, %v71
    %v77 = vmul.f32 %v76, %v75
    %v78 = vmul.f32 0.5, %v77
    %v79 = vsub.f32 1.5, %v78
    %v80 = vmul.f32 %v75, %v79
    %vm81 = vweird.f32 %v71
    %vm82 = vweird.f32 %v75
    %vm83 = vmor %vm81, %vm82
    %v84 = vsel %vm83, %v75, %v80
    %v85 = vrsqrt.pop %v72
    %v86 = vmul.f32 %v85, %v72
    %v87 = vmul.f32 %v86, %v85
    %v88 = vmul.f32 0.5, %v87
    %v89 = vsub.f32 1.5, %v88
    %v90 = vmul.f32 %v85, %v89
    %vm91 = vweird.f32 %v72
    %vm92 = vweird.f32 %v85
    %vm93 = vmor %vm91, %vm92
    %v94 = vsel %vm93, %v85, %v90
    %v95 = vrsqrt.pop %v73
    %v96 = vmul.f32 %v95, %v73
    %v97 = vmul.f32 %v96, %v95
    %v98 = vmul.f32 0.5, %v97
    %v99 = vsub.f32 1.5, %v98
    %v100 = vmul.f32 %v95, %v99
    %vm101 = vweird.f32 %v73
    %vm102 = vweird.f32 %v95
    %vm103 = vmor %vm101, %vm102
    %v104 = vsel %vm103, %v95, %v100
    %v105 = vrsqrt.pop %v74
    %v106 = vmul.f32 %v105, %v74
    %v107 = vmul.f32 %v106, %v105
    %v108 = vmul.f32 0.5, %v107
    %v109 = vsub.f32 1.5, %v108
    %v110 = vmul.f32 %v105, %v109
    %vm111 = vweird.f32 %v74
    %vm112 = vweird.f32 %v105
    %vm113 = vmor %vm111, %vm112
    %v114 = vsel %vm113, %v105, %v110
    %v115 = vmul.f32 %v47, %v84
    %v116 = vmul.f32 %v48, %v94
    %v117 = vmul.f32 %v49, %v104
    %v118 = vmul.f32 %v50, %v114
    %v120 = vperm.slane %v18, 0
    %v122 = vmul.f32 %v115, %v120
    %v123 = vmul.f32 %v116, %v120
    %v124 = vmul.f32 %v117, %v120
    %v125 = vmul.f32 %v118, %v120
    %126 = vrot.lane.b32.xlu0 %v120, 96
    %v127 = vpop.permute.xlu0 %126
    %v129 = vadd.f32 %v122, %v127
    %v130 = vadd.f32 %v123, %v127
    %v131 = vadd.f32 %v124, %v127
    %v132 = vadd.f32 %v125, %v127
    %v133 = vld [vmem:[%s1] sm:$0xff]
    %v134 = vld [vmem:[%s1 + $0x28] sm:$0xff]
    %v135 = vld [vmem:[%s1 + $0x50] sm:$0xff]
    %v136 = vld [vmem:[%s1 + $0x78] sm:$0xff]
    %v137 = vld [vmem:[%s3] sm:$0x3]
    %v139 = vperm.slane %v137, 0
    %v140 = vperm.slane %v137, 1
    %141 = vrot.lane.b32.xlu0 %v139, 64
    %v142 = vpop.permute.xlu0 %141
    %143 = vrot.lane.b32.xlu0 %v140, 64
    %v144 = vpop.permute.xlu0 %143
    %vm145 = vcmask 523264
    %v146 = vsel %vm145, %v142, %v144
    %v149 = vsel %vm23, %v129, 0
    %v152 = vsel %vm23, %v130, 0
    %v155 = vsel %vm23, %v131, 0
    %v158 = vsel %vm23, %v132, 0
    %160 = vmatpush.msra.mxu0 0.0
    %161 = vmatpush.msra.mxu0 0.0
    %162 = vmatpush.msra.mxu0 0.0
    %163 = vmatpush.msra.mxu0 0.0
    %164 = vmatpush.msra.mxu0 0.0
    %165 = vmatpush.msra.mxu0 0.0
    %166 = vmatpush.msra.mxu0 0.0
    %167 = vmatpush.msra.mxu0 0.0
    %168 = vmatpush.msra.mxu0 0.0
    %169 = vmatpush.msra.mxu0 0.0
    %170 = vmatpush.msra.mxu0 0.0
    %171 = vmatpush.msra.mxu0 0.0
    %172 = vmatpush.msra.mxu0 %v136
    %173 = vmatpush.msra.mxu0 %v135
    %174 = vmatpush.msra.mxu0 %v134
    %175 = vmatpush.msra.mxu0 %v133
    %176 = vmatmul.f32.gmra.mxu0 %v149
    %v177 = vpop.f32.mrf.mxu0
    %v178 = vadd.f32 %v146, %v177
    %179 = vmatmul.f32.gmra.mxu0 %v152
    %v180 = vpop.f32.mrf.mxu0
    %v181 = vadd.f32 %v146, %v180
    %182 = vmatmul.f32.gmra.mxu0 %v155
    %v183 = vpop.f32.mrf.mxu0
    %v184 = vadd.f32 %v146, %v183
    %185 = vmatmul.f32.gmra.mxu0 %v158
    %v186 = vpop.f32.mrf.mxu0
    %v187 = vadd.f32 %v146, %v186
    %188 = vdwg.mxu0
    %v189 = vlaneseq
    %v190 = vshrl.u32 %v189, 7
    %v191 = vadd.s32 %v190, 8
    %v192 = vadd.s32 %v190, 16
    %v193 = vadd.s32 %v190, 24
    %vm194 = vcmp.lt.s32.totalorder %v190, 0
    %v195 = vsub.s32 0, %v190
    %v196 = vsel %vm194, %v195, %v190
    %v197 = vshrl.u32 %v196, 1
    %v198 = vand.u32 %v196, 1
    %v199 = vsub.s32 0, %v198
    %v200 = vsel %vm194, %v199, %v198
    %vm201 = vcmp.lt.s32.totalorder %v191, 0
    %v202 = vsub.s32 0, %v191
    %v203 = vsel %vm201, %v202, %v191
    %v204 = vshrl.u32 %v203, 1
    %v205 = vand.u32 %v203, 1
    %v206 = vsub.s32 0, %v205
    %v207 = vsel %vm201, %v206, %v205
    %vm208 = vcmp.lt.s32.totalorder %v192, 0
    %v209 = vsub.s32 0, %v192
    %v210 = vsel %vm208, %v209, %v192
    %v211 = vshrl.u32 %v210, 1
    %v212 = vand.u32 %v210, 1
    %v213 = vsub.s32 0, %v212
    %v214 = vsel %vm208, %v213, %v212
    %vm215 = vcmp.lt.s32.totalorder %v193, 0
    %v216 = vsub.s32 0, %v193
    %v217 = vsel %vm215, %v216, %v193
    %v218 = vshrl.u32 %v217, 1
    %v219 = vand.u32 %v217, 1
    %v220 = vsub.s32 0, %v219
    %v221 = vsel %vm215, %v220, %v219
    %vm222 = vcmp.ne.s32.totalorder %v200, 0
    %vm223 = vcmp.ne.s32.totalorder %v207, 0
    %vm224 = vcmp.ne.s32.totalorder %v214, 0
    %vm225 = vcmp.ne.s32.totalorder %v221, 0
    %vm226 = vcmp.lt.s32.totalorder %v200, 0
    %vm227 = vcmp.lt.s32.totalorder %v207, 0
    %vm228 = vcmp.lt.s32.totalorder %v214, 0
    %vm229 = vcmp.lt.s32.totalorder %v221, 0
    %vm230 = vmand %vm226, %vm222
    %vm231 = vmand %vm227, %vm223
    %vm232 = vmand %vm228, %vm224
    %vm233 = vmand %vm229, %vm225
    %v234 = vadd.s32 %v200, 2
    %v235 = vadd.s32 %v207, 2
    %v236 = vadd.s32 %v214, 2
    %v237 = vadd.s32 %v221, 2
    %v238 = vsel %vm230, %v234, %v200
    %v239 = vsel %vm231, %v235, %v207
    %v240 = vsel %vm232, %v236, %v214
    %v241 = vsel %vm233, %v237, %v221
    %v242 = vlaneseq
    %v243 = vand.u32 %v242, 127
    %vm244 = vcmp.lt.s32.totalorder %v243, 0
    %v245 = vsub.s32 0, %v243
    %v246 = vsel %vm244, %v245, %v243
    %v247 = vshrl.u32 %v246, 1
    %v248 = vand.u32 %v246, 1
    %v249 = vsub.s32 0, %v248
    %v250 = vsel %vm244, %v249, %v248
    %vm251 = vcmp.ne.s32.totalorder %v250, 0
    %vm252 = vcmp.lt.s32.totalorder %v250, 0
    %vm253 = vmand %vm252, %vm251
    %v254 = vadd.s32 %v250, 2
    %v255 = vsel %vm253, %v254, %v250
    %vm256 = vcmp.eq.s32.totalorder %v238, %v255
    %vm257 = vcmp.eq.s32.totalorder %v239, %v255
    %vm258 = vcmp.eq.s32.totalorder %v240, %v255
    %vm259 = vcmp.eq.s32.totalorder %v241, %v255
    %v260 = vsel %vm256, 0.0, -1e+30
    %v261 = vsel %vm257, 0.0, -1e+30
    %v262 = vsel %vm258, 0.0, -1e+30
    %v263 = vsel %vm259, 0.0, -1e+30
    %268 = vrot.lane.b32.xlu0 %v178, 96
    %v269 = vpop.permute.xlu0 %268
    %270 = vrot.lane.b32.xlu0 %v181, 96
    %v271 = vpop.permute.xlu0 %270
    %272 = vrot.lane.b32.xlu0 %v184, 96
    %v273 = vpop.permute.xlu0 %272
    %274 = vrot.lane.b32.xlu0 %v187, 96
    %v275 = vpop.permute.xlu0 %274
    %vm276 = vcmask 64512
    %v277 = vsel %vm276, %v178, 0
    %v279 = vsel %vm276, %v181, 0
    %v281 = vsel %vm276, %v184, 0
    %v283 = vsel %vm276, %v187, 0
    %v285 = vsel %vm276, %v269, 0
    %v287 = vsel %vm276, %v271, 0
    %v289 = vsel %vm276, %v273, 0
    %v291 = vsel %vm276, %v275, 0
    %293 = vmatpush.xpose.msra.mxu0 0.0
    %294 = vmatpush.xpose.msra.mxu0 0.0
    %295 = vmatpush.xpose.msra.mxu0 0.0
    %296 = vmatpush.xpose.msra.mxu0 0.0
    %297 = vmatpush.xpose.msra.mxu0 0.0
    %298 = vmatpush.xpose.msra.mxu0 0.0
    %299 = vmatpush.xpose.msra.mxu0 0.0
    %300 = vmatpush.xpose.msra.mxu0 0.0
    %301 = vmatpush.xpose.msra.mxu0 0.0
    %302 = vmatpush.xpose.msra.mxu0 0.0
    %303 = vmatpush.xpose.msra.mxu0 0.0
    %304 = vmatpush.xpose.msra.mxu0 0.0
    %305 = vmatpush.xpose.msra.mxu0 %v291
    %306 = vmatpush.xpose.msra.mxu0 %v289
    %307 = vmatpush.xpose.msra.mxu0 %v287
    %308 = vmatpush.xpose.msra.mxu0 %v285
    %309 = vmatmul.f32.gmra.mxu0 %v277
    %v310 = vpop.f32.mrf.mxu0
    %v311 = vadd.f32 %v260, %v310
    %312 = vmatmul.f32.gmra.mxu0 %v279
    %v313 = vpop.f32.mrf.mxu0
    %v314 = vadd.f32 %v261, %v313
    %315 = vmatmul.f32.gmra.mxu0 %v281
    %v316 = vpop.f32.mrf.mxu0
    %v317 = vadd.f32 %v262, %v316
    %318 = vmatmul.f32.gmra.mxu0 %v283
    %v319 = vpop.f32.mrf.mxu0
    %v320 = vadd.f32 %v263, %v319
    %321 = vdwg.mxu0
    %v322 = vsel %vm23, %v311, -inf
    %323 = vmax.xlane.f32.xlu0 %v322
    %v324 = vpop.xlane.xlu0 %323
    %v325 = vsel %vm23, %v314, -inf
    %326 = vmax.xlane.f32.xlu0 %v325
    %v327 = vpop.xlane.xlu0 %326
    %v328 = vsel %vm23, %v317, -inf
    %329 = vmax.xlane.f32.xlu0 %v328
    %v330 = vpop.xlane.xlu0 %329
    %v331 = vsel %vm23, %v320, -inf
    %332 = vmax.xlane.f32.xlu0 %v331
    %v333 = vpop.xlane.xlu0 %332
    %v334 = vsub.f32 %v311, %v324
    %v335 = vsub.f32 %v314, %v327
    %v336 = vsub.f32 %v317, %v330
    %v337 = vsub.f32 %v320, %v333
    %v338 = vmul.f32 %v334, 1.442695
    %v339 = vpow.pop %v338
    %v340 = vmul.f32 %v335, 1.442695
    %v341 = vpow.pop %v340
    %v342 = vmul.f32 %v336, 1.442695
    %v343 = vpow.pop %v342
    %v344 = vmul.f32 %v337, 1.442695
    %v345 = vpow.pop %v344
    %v346 = vsel %vm23, %v339, 0.0
    %347 = vadd.xlane.f32.xlu0 %v346
    %v348 = vpop.xlane.xlu0 %347
    %v349 = vsel %vm23, %v341, 0.0
    %350 = vadd.xlane.f32.xlu0 %v349
    %v351 = vpop.xlane.xlu0 %350
    %v352 = vsel %vm23, %v343, 0.0
    %353 = vadd.xlane.f32.xlu0 %v352
    %v354 = vpop.xlane.xlu0 %353
    %v355 = vsel %vm23, %v345, 0.0
    %356 = vadd.xlane.f32.xlu0 %v355
    %v357 = vpop.xlane.xlu0 %356
    %358 = vrot.lane.b32.xlu0 %v178, 64
    %v359 = vpop.permute.xlu0 %358
    %360 = vrot.lane.b32.xlu0 %v181, 64
    %v361 = vpop.permute.xlu0 %360
    %362 = vrot.lane.b32.xlu0 %v184, 64
    %v363 = vpop.permute.xlu0 %362
    %364 = vrot.lane.b32.xlu0 %v187, 64
    %v365 = vpop.permute.xlu0 %364
    %v371 = vsel %vm23, %v339, 0
    %v374 = vsel %vm23, %v341, 0
    %v377 = vsel %vm23, %v343, 0
    %v380 = vsel %vm23, %v345, 0
    %382 = vmatpush.msra.mxu0 0.0
    %383 = vmatpush.msra.mxu0 0.0
    %384 = vmatpush.msra.mxu0 0.0
    %385 = vmatpush.msra.mxu0 0.0
    %386 = vmatpush.msra.mxu0 0.0
    %387 = vmatpush.msra.mxu0 0.0
    %388 = vmatpush.msra.mxu0 0.0
    %389 = vmatpush.msra.mxu0 0.0
    %390 = vmatpush.msra.mxu0 0.0
    %391 = vmatpush.msra.mxu0 0.0
    %392 = vmatpush.msra.mxu0 0.0
    %393 = vmatpush.msra.mxu0 0.0
    %394 = vmatpush.msra.mxu0 %v365
    %395 = vmatpush.msra.mxu0 %v363
    %396 = vmatpush.msra.mxu0 %v361
    %397 = vmatpush.msra.mxu0 %v359
    %398 = vmatmul.f32.gmra.mxu0 %v371
    %v399 = vpop.f32.mrf.mxu0
    %v400 = vadd.f32 0.0, %v399
    %401 = vmatmul.f32.gmra.mxu0 %v374
    %v402 = vpop.f32.mrf.mxu0
    %v403 = vadd.f32 0.0, %v402
    %404 = vmatmul.f32.gmra.mxu0 %v377
    %v405 = vpop.f32.mrf.mxu0
    %v406 = vadd.f32 0.0, %v405
    %407 = vmatmul.f32.gmra.mxu0 %v380
    %v408 = vpop.f32.mrf.mxu0
    %v409 = vadd.f32 0.0, %v408
    %410 = vdwg.mxu0
    %v411 = vrcp.pop %v348
    %v412 = vmul.f32 %v348, %v411
    %v413 = vsub.f32 1.0, %v412
    %v414 = vmul.f32 %v411, %v413
    %v415 = vadd.f32 %v411, %v414
    %vm416 = vweird.f32 %v348
    %vm417 = vweird.f32 %v411
    %vm418 = vmor %vm416, %vm417
    %v419 = vsel %vm418, %v411, %v415
    %v420 = vand.u32 2147483647, %v348
    %vm421 = vcmp.eq.f32.partialorder %v420, 8.507059e+37
    %v422 = vand.u32 %v348, 2147483648
    %v423 = vor.u32 1.1754944e-38, %v422
    %v424 = vsel %vm421, %v423, %v419
    %v425 = vrcp.pop %v351
    %v426 = vmul.f32 %v351, %v425
    %v427 = vsub.f32 1.0, %v426
    %v428 = vmul.f32 %v425, %v427
    %v429 = vadd.f32 %v425, %v428
    %vm430 = vweird.f32 %v351
    %vm431 = vweird.f32 %v425
    %vm432 = vmor %vm430, %vm431
    %v433 = vsel %vm432, %v425, %v429
    %v434 = vand.u32 2147483647, %v351
    %vm435 = vcmp.eq.f32.partialorder %v434, 8.507059e+37
    %v436 = vand.u32 %v351, 2147483648
    %v437 = vor.u32 1.1754944e-38, %v436
    %v438 = vsel %vm435, %v437, %v433
    %v439 = vrcp.pop %v354
    %v440 = vmul.f32 %v354, %v439
    %v441 = vsub.f32 1.0, %v440
    %v442 = vmul.f32 %v439, %v441
    %v443 = vadd.f32 %v439, %v442
    %vm444 = vweird.f32 %v354
    %vm445 = vweird.f32 %v439
    %vm446 = vmor %vm444, %vm445
    %v447 = vsel %vm446, %v439, %v443
    %v448 = vand.u32 2147483647, %v354
    %vm449 = vcmp.eq.f32.partialorder %v448, 8.507059e+37
    %v450 = vand.u32 %v354, 2147483648
    %v451 = vor.u32 1.1754944e-38, %v450
    %v452 = vsel %vm449, %v451, %v447
    %v453 = vrcp.pop %v357
    %v454 = vmul.f32 %v357, %v453
    %v455 = vsub.f32 1.0, %v454
    %v456 = vmul.f32 %v453, %v455
    %v457 = vadd.f32 %v453, %v456
    %vm458 = vweird.f32 %v357
    %vm459 = vweird.f32 %v453
    %vm460 = vmor %vm458, %vm459
    %v461 = vsel %vm460, %v453, %v457
    %v462 = vand.u32 2147483647, %v357
    %vm463 = vcmp.eq.f32.partialorder %v462, 8.507059e+37
    %v464 = vand.u32 %v357, 2147483648
    %v465 = vor.u32 1.1754944e-38, %v464
    %v466 = vsel %vm463, %v465, %v461
    %v467 = vmul.f32 %v400, %v424
    %v468 = vmul.f32 %v403, %v438
    %v469 = vmul.f32 %v406, %v452
    %v470 = vmul.f32 %v409, %v466
    %471 = vst.msk [vmem:[#allocation2] sm:$0xff] %vm276, %v467
    %472 = vst.msk [vmem:[#allocation2 + $0x8] sm:$0xff] %vm276, %v468
    %473 = vst.msk [vmem:[#allocation2 + $0x10] sm:$0xff] %vm276, %v469
    %474 = vst.msk [vmem:[#allocation2 + $0x18] sm:$0xff] %vm276, %v470
    %475 = vrot.lane.b32.xlu0 %v178, 120
    %v476 = vpop.permute.xlu0 %475
    %477 = vrot.lane.b32.xlu0 %v181, 120
    %v478 = vpop.permute.xlu0 %477
    %479 = vrot.lane.b32.xlu0 %v184, 120
    %v480 = vpop.permute.xlu0 %479
    %481 = vrot.lane.b32.xlu0 %v187, 120
    %v482 = vpop.permute.xlu0 %481
    %483 = vrot.lane.b32.xlu0 %v178, 88
    %v484 = vpop.permute.xlu0 %483
    %485 = vrot.lane.b32.xlu0 %v181, 88
    %v486 = vpop.permute.xlu0 %485
    %487 = vrot.lane.b32.xlu0 %v184, 88
    %v488 = vpop.permute.xlu0 %487
    %489 = vrot.lane.b32.xlu0 %v187, 88
    %v490 = vpop.permute.xlu0 %489
    %v491 = vsel %vm276, %v476, 0
    %v493 = vsel %vm276, %v478, 0
    %v495 = vsel %vm276, %v480, 0
    %v497 = vsel %vm276, %v482, 0
    %v499 = vsel %vm276, %v484, 0
    %v501 = vsel %vm276, %v486, 0
    %v503 = vsel %vm276, %v488, 0
    %v505 = vsel %vm276, %v490, 0
    %507 = vmatpush.xpose.msra.mxu0 0.0
    %508 = vmatpush.xpose.msra.mxu0 0.0
    %509 = vmatpush.xpose.msra.mxu0 0.0
    %510 = vmatpush.xpose.msra.mxu0 0.0
    %511 = vmatpush.xpose.msra.mxu0 0.0
    %512 = vmatpush.xpose.msra.mxu0 0.0
    %513 = vmatpush.xpose.msra.mxu0 0.0
    %514 = vmatpush.xpose.msra.mxu0 0.0
    %515 = vmatpush.xpose.msra.mxu0 0.0
    %516 = vmatpush.xpose.msra.mxu0 0.0
    %517 = vmatpush.xpose.msra.mxu0 0.0
    %518 = vmatpush.xpose.msra.mxu0 0.0
    %519 = vmatpush.xpose.msra.mxu0 %v505
    %520 = vmatpush.xpose.msra.mxu0 %v503
    %521 = vmatpush.xpose.msra.mxu0 %v501
    %522 = vmatpush.xpose.msra.mxu0 %v499
    %523 = vmatmul.f32.gmra.mxu0 %v491
    %v524 = vpop.f32.mrf.mxu0
    %v525 = vadd.f32 %v260, %v524
    %526 = vmatmul.f32.gmra.mxu0 %v493
    %v527 = vpop.f32.mrf.mxu0
    %v528 = vadd.f32 %v261, %v527
    %529 = vmatmul.f32.gmra.mxu0 %v495
    %v530 = vpop.f32.mrf.mxu0
    %v531 = vadd.f32 %v262, %v530
    %532 = vmatmul.f32.gmra.mxu0 %v497
    %v533 = vpop.f32.mrf.mxu0
    %v534 = vadd.f32 %v263, %v533
    %535 = vdwg.mxu0
    %v536 = vsel %vm23, %v525, -inf
    %537 = vmax.xlane.f32.xlu0 %v536
    %v538 = vpop.xlane.xlu0 %537
    %v539 = vsel %vm23, %v528, -inf
    %540 = vmax.xlane.f32.xlu0 %v539
    %v541 = vpop.xlane.xlu0 %540
    %v542 = vsel %vm23, %v531, -inf
    %543 = vmax.xlane.f32.xlu0 %v542
    %v544 = vpop.xlane.xlu0 %543
    %v545 = vsel %vm23, %v534, -inf
    %546 = vmax.xlane.f32.xlu0 %v545
    %v547 = vpop.xlane.xlu0 %546
    %v548 = vsub.f32 %v525, %v538
    %v549 = vsub.f32 %v528, %v541
    %v550 = vsub.f32 %v531, %v544
    %v551 = vsub.f32 %v534, %v547
    %v552 = vmul.f32 %v548, 1.442695
    %v553 = vpow.pop %v552
    %v554 = vmul.f32 %v549, 1.442695
    %v555 = vpow.pop %v554
    %v556 = vmul.f32 %v550, 1.442695
    %v557 = vpow.pop %v556
    %v558 = vmul.f32 %v551, 1.442695
    %v559 = vpow.pop %v558
    %v560 = vsel %vm23, %v553, 0.0
    %561 = vadd.xlane.f32.xlu0 %v560
    %v562 = vpop.xlane.xlu0 %561
    %v563 = vsel %vm23, %v555, 0.0
    %564 = vadd.xlane.f32.xlu0 %v563
    %v565 = vpop.xlane.xlu0 %564
    %v566 = vsel %vm23, %v557, 0.0
    %567 = vadd.xlane.f32.xlu0 %v566
    %v568 = vpop.xlane.xlu0 %567
    %v569 = vsel %vm23, %v559, 0.0
    %570 = vadd.xlane.f32.xlu0 %v569
    %v571 = vpop.xlane.xlu0 %570
    %572 = vrot.lane.b32.xlu0 %v178, 56
    %v573 = vpop.permute.xlu0 %572
    %574 = vrot.lane.b32.xlu0 %v181, 56
    %v575 = vpop.permute.xlu0 %574
    %576 = vrot.lane.b32.xlu0 %v184, 56
    %v577 = vpop.permute.xlu0 %576
    %578 = vrot.lane.b32.xlu0 %v187, 56
    %v579 = vpop.permute.xlu0 %578
    %v585 = vsel %vm23, %v553, 0
    %v588 = vsel %vm23, %v555, 0
    %v591 = vsel %vm23, %v557, 0
    %v594 = vsel %vm23, %v559, 0
    %596 = vmatpush.msra.mxu0 0.0
    %597 = vmatpush.msra.mxu0 0.0
    %598 = vmatpush.msra.mxu0 0.0
    %599 = vmatpush.msra.mxu0 0.0
    %600 = vmatpush.msra.mxu0 0.0
    %601 = vmatpush.msra.mxu0 0.0
    %602 = vmatpush.msra.mxu0 0.0
    %603 = vmatpush.msra.mxu0 0.0
    %604 = vmatpush.msra.mxu0 0.0
    %605 = vmatpush.msra.mxu0 0.0
    %606 = vmatpush.msra.mxu0 0.0
    %607 = vmatpush.msra.mxu0 0.0
    %608 = vmatpush.msra.mxu0 %v579
    %609 = vmatpush.msra.mxu0 %v577
    %610 = vmatpush.msra.mxu0 %v575
    %611 = vmatpush.msra.mxu0 %v573
    %612 = vmatmul.f32.gmra.mxu0 %v585
    %v613 = vpop.f32.mrf.mxu0
    %v614 = vadd.f32 0.0, %v613
    %615 = vmatmul.f32.gmra.mxu0 %v588
    %v616 = vpop.f32.mrf.mxu0
    %v617 = vadd.f32 0.0, %v616
    %618 = vmatmul.f32.gmra.mxu0 %v591
    %v619 = vpop.f32.mrf.mxu0
    %v620 = vadd.f32 0.0, %v619
    %621 = vmatmul.f32.gmra.mxu0 %v594
    %v622 = vpop.f32.mrf.mxu0
    %v623 = vadd.f32 0.0, %v622
    %624 = vdwg.mxu0
    %v625 = vrcp.pop %v562
    %v626 = vmul.f32 %v562, %v625
    %v627 = vsub.f32 1.0, %v626
    %v628 = vmul.f32 %v625, %v627
    %v629 = vadd.f32 %v625, %v628
    %vm630 = vweird.f32 %v562
    %vm631 = vweird.f32 %v625
    %vm632 = vmor %vm630, %vm631
    %v633 = vsel %vm632, %v625, %v629
    %v634 = vand.u32 2147483647, %v562
    %vm635 = vcmp.eq.f32.partialorder %v634, 8.507059e+37
    %v636 = vand.u32 %v562, 2147483648
    %v637 = vor.u32 1.1754944e-38, %v636
    %v638 = vsel %vm635, %v637, %v633
    %v639 = vrcp.pop %v565
    %v640 = vmul.f32 %v565, %v639
    %v641 = vsub.f32 1.0, %v640
    %v642 = vmul.f32 %v639, %v641
    %v643 = vadd.f32 %v639, %v642
    %vm644 = vweird.f32 %v565
    %vm645 = vweird.f32 %v639
    %vm646 = vmor %vm644, %vm645
    %v647 = vsel %vm646, %v639, %v643
    %v648 = vand.u32 2147483647, %v565
    %vm649 = vcmp.eq.f32.partialorder %v648, 8.507059e+37
    %v650 = vand.u32 %v565, 2147483648
    %v651 = vor.u32 1.1754944e-38, %v650
    %v652 = vsel %vm649, %v651, %v647
    %v653 = vrcp.pop %v568
    %v654 = vmul.f32 %v568, %v653
    %v655 = vsub.f32 1.0, %v654
    %v656 = vmul.f32 %v653, %v655
    %v657 = vadd.f32 %v653, %v656
    %vm658 = vweird.f32 %v568
    %vm659 = vweird.f32 %v653
    %vm660 = vmor %vm658, %vm659
    %v661 = vsel %vm660, %v653, %v657
    %v662 = vand.u32 2147483647, %v568
    %vm663 = vcmp.eq.f32.partialorder %v662, 8.507059e+37
    %v664 = vand.u32 %v568, 2147483648
    %v665 = vor.u32 1.1754944e-38, %v664
    %v666 = vsel %vm663, %v665, %v661
    %v667 = vrcp.pop %v571
    %v668 = vmul.f32 %v571, %v667
    %v669 = vsub.f32 1.0, %v668
    %v670 = vmul.f32 %v667, %v669
    %v671 = vadd.f32 %v667, %v670
    %vm672 = vweird.f32 %v571
    %vm673 = vweird.f32 %v667
    %vm674 = vmor %vm672, %vm673
    %v675 = vsel %vm674, %v667, %v671
    %v676 = vand.u32 2147483647, %v571
    %vm677 = vcmp.eq.f32.partialorder %v676, 8.507059e+37
    %v678 = vand.u32 %v571, 2147483648
    %v679 = vor.u32 1.1754944e-38, %v678
    %v680 = vsel %vm677, %v679, %v675
    %v681 = vmul.f32 %v614, %v638
    %v682 = vmul.f32 %v617, %v652
    %v683 = vmul.f32 %v620, %v666
    %v684 = vmul.f32 %v623, %v680
    %689 = vrot.lane.b32.xlu0 %v681, 8
    %v690 = vpop.permute.xlu0 %689
    %691 = vrot.lane.b32.xlu0 %v682, 8
    %v692 = vpop.permute.xlu0 %691
    %693 = vrot.lane.b32.xlu0 %v683, 8
    %v694 = vpop.permute.xlu0 %693
    %695 = vrot.lane.b32.xlu0 %v684, 8
    %v696 = vpop.permute.xlu0 %695
    %vm701 = vcmask 130112
    %702 = vst.msk [vmem:[#allocation2] sm:$0xff] %vm701, %v690
    %703 = vst.msk [vmem:[#allocation2 + $0x8] sm:$0xff] %vm701, %v692
    %704 = vst.msk [vmem:[#allocation2 + $0x10] sm:$0xff] %vm701, %v694
    %705 = vst.msk [vmem:[#allocation2 + $0x18] sm:$0xff] %vm701, %v696
    %706 = vrot.lane.b32.xlu0 %v178, 112
    %v707 = vpop.permute.xlu0 %706
    %708 = vrot.lane.b32.xlu0 %v181, 112
    %v709 = vpop.permute.xlu0 %708
    %710 = vrot.lane.b32.xlu0 %v184, 112
    %v711 = vpop.permute.xlu0 %710
    %712 = vrot.lane.b32.xlu0 %v187, 112
    %v713 = vpop.permute.xlu0 %712
    %714 = vrot.lane.b32.xlu0 %v178, 80
    %v715 = vpop.permute.xlu0 %714
    %716 = vrot.lane.b32.xlu0 %v181, 80
    %v717 = vpop.permute.xlu0 %716
    %718 = vrot.lane.b32.xlu0 %v184, 80
    %v719 = vpop.permute.xlu0 %718
    %720 = vrot.lane.b32.xlu0 %v187, 80
    %v721 = vpop.permute.xlu0 %720
    %v722 = vsel %vm276, %v707, 0
    %v724 = vsel %vm276, %v709, 0
    %v726 = vsel %vm276, %v711, 0
    %v728 = vsel %vm276, %v713, 0
    %v730 = vsel %vm276, %v715, 0
    %v732 = vsel %vm276, %v717, 0
    %v734 = vsel %vm276, %v719, 0
    %v736 = vsel %vm276, %v721, 0
    %738 = vmatpush.xpose.msra.mxu0 0.0
    %739 = vmatpush.xpose.msra.mxu0 0.0
    %740 = vmatpush.xpose.msra.mxu0 0.0
    %741 = vmatpush.xpose.msra.mxu0 0.0
    %742 = vmatpush.xpose.msra.mxu0 0.0
    %743 = vmatpush.xpose.msra.mxu0 0.0
    %744 = vmatpush.xpose.msra.mxu0 0.0
    %745 = vmatpush.xpose.msra.mxu0 0.0
    %746 = vmatpush.xpose.msra.mxu0 0.0
    %747 = vmatpush.xpose.msra.mxu0 0.0
    %748 = vmatpush.xpose.msra.mxu0 0.0
    %749 = vmatpush.xpose.msra.mxu0 0.0
    %750 = vmatpush.xpose.msra.mxu0 %v736
    %751 = vmatpush.xpose.msra.mxu0 %v734
    %752 = vmatpush.xpose.msra.mxu0 %v732
    %753 = vmatpush.xpose.msra.mxu0 %v730
    %754 = vmatmul.f32.gmra.mxu0 %v722
    %v755 = vpop.f32.mrf.mxu0
    %v756 = vadd.f32 %v260, %v755
    %757 = vmatmul.f32.gmra.mxu0 %v724
    %v758 = vpop.f32.mrf.mxu0
    %v759 = vadd.f32 %v261, %v758
    %760 = vmatmul.f32.gmra.mxu0 %v726
    %v761 = vpop.f32.mrf.mxu0
    %v762 = vadd.f32 %v262, %v761
    %763 = vmatmul.f32.gmra.mxu0 %v728
    %v764 = vpop.f32.mrf.mxu0
    %v765 = vadd.f32 %v263, %v764
    %766 = vdwg.mxu0
    %v767 = vsel %vm23, %v756, -inf
    %768 = vmax.xlane.f32.xlu0 %v767
    %v769 = vpop.xlane.xlu0 %768
    %v770 = vsel %vm23, %v759, -inf
    %771 = vmax.xlane.f32.xlu0 %v770
    %v772 = vpop.xlane.xlu0 %771
    %v773 = vsel %vm23, %v762, -inf
    %774 = vmax.xlane.f32.xlu0 %v773
    %v775 = vpop.xlane.xlu0 %774
    %v776 = vsel %vm23, %v765, -inf
    %777 = vmax.xlane.f32.xlu0 %v776
    %v778 = vpop.xlane.xlu0 %777
    %v779 = vsub.f32 %v756, %v769
    %v780 = vsub.f32 %v759, %v772
    %v781 = vsub.f32 %v762, %v775
    %v782 = vsub.f32 %v765, %v778
    %v783 = vmul.f32 %v779, 1.442695
    %v784 = vpow.pop %v783
    %v785 = vmul.f32 %v780, 1.442695
    %v786 = vpow.pop %v785
    %v787 = vmul.f32 %v781, 1.442695
    %v788 = vpow.pop %v787
    %v789 = vmul.f32 %v782, 1.442695
    %v790 = vpow.pop %v789
    %v791 = vsel %vm23, %v784, 0.0
    %792 = vadd.xlane.f32.xlu0 %v791
    %v793 = vpop.xlane.xlu0 %792
    %v794 = vsel %vm23, %v786, 0.0
    %795 = vadd.xlane.f32.xlu0 %v794
    %v796 = vpop.xlane.xlu0 %795
    %v797 = vsel %vm23, %v788, 0.0
    %798 = vadd.xlane.f32.xlu0 %v797
    %v799 = vpop.xlane.xlu0 %798
    %v800 = vsel %vm23, %v790, 0.0
    %801 = vadd.xlane.f32.xlu0 %v800
    %v802 = vpop.xlane.xlu0 %801
    %803 = vrot.lane.b32.xlu0 %v178, 48
    %v804 = vpop.permute.xlu0 %803
    %805 = vrot.lane.b32.xlu0 %v181, 48
    %v806 = vpop.permute.xlu0 %805
    %807 = vrot.lane.b32.xlu0 %v184, 48
    %v808 = vpop.permute.xlu0 %807
    %809 = vrot.lane.b32.xlu0 %v187, 48
    %v810 = vpop.permute.xlu0 %809
    %v816 = vsel %vm23, %v784, 0
    %v819 = vsel %vm23, %v786, 0
    %v822 = vsel %vm23, %v788, 0
    %v825 = vsel %vm23, %v790, 0
    %827 = vmatpush.msra.mxu0 0.0
    %828 = vmatpush.msra.mxu0 0.0
    %829 = vmatpush.msra.mxu0 0.0
    %830 = vmatpush.msra.mxu0 0.0
    %831 = vmatpush.msra.mxu0 0.0
    %832 = vmatpush.msra.mxu0 0.0
    %833 = vmatpush.msra.mxu0 0.0
    %834 = vmatpush.msra.mxu0 0.0
    %835 = vmatpush.msra.mxu0 0.0
    %836 = vmatpush.msra.mxu0 0.0
    %837 = vmatpush.msra.mxu0 0.0
    %838 = vmatpush.msra.mxu0 0.0
    %839 = vmatpush.msra.mxu0 %v810
    %840 = vmatpush.msra.mxu0 %v808
    %841 = vmatpush.msra.mxu0 %v806
    %842 = vmatpush.msra.mxu0 %v804
    %843 = vmatmul.f32.gmra.mxu0 %v816
    %v844 = vpop.f32.mrf.mxu0
    %v845 = vadd.f32 0.0, %v844
    %846 = vmatmul.f32.gmra.mxu0 %v819
    %v847 = vpop.f32.mrf.mxu0
    %v848 = vadd.f32 0.0, %v847
    %849 = vmatmul.f32.gmra.mxu0 %v822
    %v850 = vpop.f32.mrf.mxu0
    %v851 = vadd.f32 0.0, %v850
    %852 = vmatmul.f32.gmra.mxu0 %v825
    %v853 = vpop.f32.mrf.mxu0
    %v854 = vadd.f32 0.0, %v853
    %855 = vdwg.mxu0
    %v856 = vrcp.pop %v793
    %v857 = vmul.f32 %v793, %v856
    %v858 = vsub.f32 1.0, %v857
    %v859 = vmul.f32 %v856, %v858
    %v860 = vadd.f32 %v856, %v859
    %vm861 = vweird.f32 %v793
    %vm862 = vweird.f32 %v856
    %vm863 = vmor %vm861, %vm862
    %v864 = vsel %vm863, %v856, %v860
    %v865 = vand.u32 2147483647, %v793
    %vm866 = vcmp.eq.f32.partialorder %v865, 8.507059e+37
    %v867 = vand.u32 %v793, 2147483648
    %v868 = vor.u32 1.1754944e-38, %v867
    %v869 = vsel %vm866, %v868, %v864
    %v870 = vrcp.pop %v796
    %v871 = vmul.f32 %v796, %v870
    %v872 = vsub.f32 1.0, %v871
    %v873 = vmul.f32 %v870, %v872
    %v874 = vadd.f32 %v870, %v873
    %vm875 = vweird.f32 %v796
    %vm876 = vweird.f32 %v870
    %vm877 = vmor %vm875, %vm876
    %v878 = vsel %vm877, %v870, %v874
    %v879 = vand.u32 2147483647, %v796
    %vm880 = vcmp.eq.f32.partialorder %v879, 8.507059e+37
    %v881 = vand.u32 %v796, 2147483648
    %v882 = vor.u32 1.1754944e-38, %v881
    %v883 = vsel %vm880, %v882, %v878
    %v884 = vrcp.pop %v799
    %v885 = vmul.f32 %v799, %v884
    %v886 = vsub.f32 1.0, %v885
    %v887 = vmul.f32 %v884, %v886
    %v888 = vadd.f32 %v884, %v887
    %vm889 = vweird.f32 %v799
    %vm890 = vweird.f32 %v884
    %vm891 = vmor %vm889, %vm890
    %v892 = vsel %vm891, %v884, %v888
    %v893 = vand.u32 2147483647, %v799
    %vm894 = vcmp.eq.f32.partialorder %v893, 8.507059e+37
    %v895 = vand.u32 %v799, 2147483648
    %v896 = vor.u32 1.1754944e-38, %v895
    %v897 = vsel %vm894, %v896, %v892
    %v898 = vrcp.pop %v802
    %v899 = vmul.f32 %v802, %v898
    %v900 = vsub.f32 1.0, %v899
    %v901 = vmul.f32 %v898, %v900
    %v902 = vadd.f32 %v898, %v901
    %vm903 = vweird.f32 %v802
    %vm904 = vweird.f32 %v898
    %vm905 = vmor %vm903, %vm904
    %v906 = vsel %vm905, %v898, %v902
    %v907 = vand.u32 2147483647, %v802
    %vm908 = vcmp.eq.f32.partialorder %v907, 8.507059e+37
    %v909 = vand.u32 %v802, 2147483648
    %v910 = vor.u32 1.1754944e-38, %v909
    %v911 = vsel %vm908, %v910, %v906
    %v912 = vmul.f32 %v845, %v869
    %v913 = vmul.f32 %v848, %v883
    %v914 = vmul.f32 %v851, %v897
    %v915 = vmul.f32 %v854, %v911
    %920 = vrot.lane.b32.xlu0 %v912, 16
    %v921 = vpop.permute.xlu0 %920
    %922 = vrot.lane.b32.xlu0 %v913, 16
    %v923 = vpop.permute.xlu0 %922
    %924 = vrot.lane.b32.xlu0 %v914, 16
    %v925 = vpop.permute.xlu0 %924
    %926 = vrot.lane.b32.xlu0 %v915, 16
    %v927 = vpop.permute.xlu0 %926
    %vm932 = vcmask 195712
    %933 = vst.msk [vmem:[#allocation2] sm:$0xff] %vm932, %v921
    %934 = vst.msk [vmem:[#allocation2 + $0x8] sm:$0xff] %vm932, %v923
    %935 = vst.msk [vmem:[#allocation2 + $0x10] sm:$0xff] %vm932, %v925
    %936 = vst.msk [vmem:[#allocation2 + $0x18] sm:$0xff] %vm932, %v927
    %937 = vrot.lane.b32.xlu0 %v178, 104
    %v938 = vpop.permute.xlu0 %937
    %939 = vrot.lane.b32.xlu0 %v181, 104
    %v940 = vpop.permute.xlu0 %939
    %941 = vrot.lane.b32.xlu0 %v184, 104
    %v942 = vpop.permute.xlu0 %941
    %943 = vrot.lane.b32.xlu0 %v187, 104
    %v944 = vpop.permute.xlu0 %943
    %945 = vrot.lane.b32.xlu0 %v178, 72
    %v946 = vpop.permute.xlu0 %945
    %947 = vrot.lane.b32.xlu0 %v181, 72
    %v948 = vpop.permute.xlu0 %947
    %949 = vrot.lane.b32.xlu0 %v184, 72
    %v950 = vpop.permute.xlu0 %949
    %951 = vrot.lane.b32.xlu0 %v187, 72
    %v952 = vpop.permute.xlu0 %951
    %v953 = vsel %vm276, %v938, 0
    %v955 = vsel %vm276, %v940, 0
    %v957 = vsel %vm276, %v942, 0
    %v959 = vsel %vm276, %v944, 0
    %v961 = vsel %vm276, %v946, 0
    %v963 = vsel %vm276, %v948, 0
    %v965 = vsel %vm276, %v950, 0
    %v967 = vsel %vm276, %v952, 0
    %969 = vmatpush.xpose.msra.mxu0 0.0
    %970 = vmatpush.xpose.msra.mxu0 0.0
    %971 = vmatpush.xpose.msra.mxu0 0.0
    %972 = vmatpush.xpose.msra.mxu0 0.0
    %973 = vmatpush.xpose.msra.mxu0 0.0
    %974 = vmatpush.xpose.msra.mxu0 0.0
    %975 = vmatpush.xpose.msra.mxu0 0.0
    %976 = vmatpush.xpose.msra.mxu0 0.0
    %977 = vmatpush.xpose.msra.mxu0 0.0
    %978 = vmatpush.xpose.msra.mxu0 0.0
    %979 = vmatpush.xpose.msra.mxu0 0.0
    %980 = vmatpush.xpose.msra.mxu0 0.0
    %981 = vmatpush.xpose.msra.mxu0 %v967
    %982 = vmatpush.xpose.msra.mxu0 %v965
    %983 = vmatpush.xpose.msra.mxu0 %v963
    %984 = vmatpush.xpose.msra.mxu0 %v961
    %985 = vmatmul.f32.gmra.mxu0 %v953
    %v986 = vpop.f32.mrf.mxu0
    %v987 = vadd.f32 %v260, %v986
    %988 = vmatmul.f32.gmra.mxu0 %v955
    %v989 = vpop.f32.mrf.mxu0
    %v990 = vadd.f32 %v261, %v989
    %991 = vmatmul.f32.gmra.mxu0 %v957
    %v992 = vpop.f32.mrf.mxu0
    %v993 = vadd.f32 %v262, %v992
    %994 = vmatmul.f32.gmra.mxu0 %v959
    %v995 = vpop.f32.mrf.mxu0
    %v996 = vadd.f32 %v263, %v995
    %997 = vdwg.mxu0
    %v998 = vsel %vm23, %v987, -inf
    %999 = vmax.xlane.f32.xlu0 %v998
    %v1000 = vpop.xlane.xlu0 %999
    %v1001 = vsel %vm23, %v990, -inf
    %1002 = vmax.xlane.f32.xlu0 %v1001
    %v1003 = vpop.xlane.xlu0 %1002
    %v1004 = vsel %vm23, %v993, -inf
    %1005 = vmax.xlane.f32.xlu0 %v1004
    %v1006 = vpop.xlane.xlu0 %1005
    %v1007 = vsel %vm23, %v996, -inf
    %1008 = vmax.xlane.f32.xlu0 %v1007
    %v1009 = vpop.xlane.xlu0 %1008
    %v1010 = vsub.f32 %v987, %v1000
    %v1011 = vsub.f32 %v990, %v1003
    %v1012 = vsub.f32 %v993, %v1006
    %v1013 = vsub.f32 %v996, %v1009
    %v1014 = vmul.f32 %v1010, 1.442695
    %v1015 = vpow.pop %v1014
    %v1016 = vmul.f32 %v1011, 1.442695
    %v1017 = vpow.pop %v1016
    %v1018 = vmul.f32 %v1012, 1.442695
    %v1019 = vpow.pop %v1018
    %v1020 = vmul.f32 %v1013, 1.442695
    %v1021 = vpow.pop %v1020
    %v1022 = vsel %vm23, %v1015, 0.0
    %1023 = vadd.xlane.f32.xlu0 %v1022
    %v1024 = vpop.xlane.xlu0 %1023
    %v1025 = vsel %vm23, %v1017, 0.0
    %1026 = vadd.xlane.f32.xlu0 %v1025
    %v1027 = vpop.xlane.xlu0 %1026
    %v1028 = vsel %vm23, %v1019, 0.0
    %1029 = vadd.xlane.f32.xlu0 %v1028
    %v1030 = vpop.xlane.xlu0 %1029
    %v1031 = vsel %vm23, %v1021, 0.0
    %1032 = vadd.xlane.f32.xlu0 %v1031
    %v1033 = vpop.xlane.xlu0 %1032
    %1034 = vrot.lane.b32.xlu0 %v178, 40
    %v1035 = vpop.permute.xlu0 %1034
    %1036 = vrot.lane.b32.xlu0 %v181, 40
    %v1037 = vpop.permute.xlu0 %1036
    %1038 = vrot.lane.b32.xlu0 %v184, 40
    %v1039 = vpop.permute.xlu0 %1038
    %1040 = vrot.lane.b32.xlu0 %v187, 40
    %v1041 = vpop.permute.xlu0 %1040
    %v1047 = vsel %vm23, %v1015, 0
    %v1050 = vsel %vm23, %v1017, 0
    %v1053 = vsel %vm23, %v1019, 0
    %v1056 = vsel %vm23, %v1021, 0
    %1058 = vmatpush.msra.mxu0 0.0
    %1059 = vmatpush.msra.mxu0 0.0
    %1060 = vmatpush.msra.mxu0 0.0
    %1061 = vmatpush.msra.mxu0 0.0
    %1062 = vmatpush.msra.mxu0 0.0
    %1063 = vmatpush.msra.mxu0 0.0
    %1064 = vmatpush.msra.mxu0 0.0
    %1065 = vmatpush.msra.mxu0 0.0
    %1066 = vmatpush.msra.mxu0 0.0
    %1067 = vmatpush.msra.mxu0 0.0
    %1068 = vmatpush.msra.mxu0 0.0
    %1069 = vmatpush.msra.mxu0 0.0
    %1070 = vmatpush.msra.mxu0 %v1041
    %1071 = vmatpush.msra.mxu0 %v1039
    %1072 = vmatpush.msra.mxu0 %v1037
    %1073 = vmatpush.msra.mxu0 %v1035
    %1074 = vmatmul.f32.gmra.mxu0 %v1047
    %v1075 = vpop.f32.mrf.mxu0
    %v1076 = vadd.f32 0.0, %v1075
    %1077 = vmatmul.f32.gmra.mxu0 %v1050
    %v1078 = vpop.f32.mrf.mxu0
    %v1079 = vadd.f32 0.0, %v1078
    %1080 = vmatmul.f32.gmra.mxu0 %v1053
    %v1081 = vpop.f32.mrf.mxu0
    %v1082 = vadd.f32 0.0, %v1081
    %1083 = vmatmul.f32.gmra.mxu0 %v1056
    %v1084 = vpop.f32.mrf.mxu0
    %v1085 = vadd.f32 0.0, %v1084
    %1086 = vdwg.mxu0
    %v1087 = vrcp.pop %v1024
    %v1088 = vmul.f32 %v1024, %v1087
    %v1089 = vsub.f32 1.0, %v1088
    %v1090 = vmul.f32 %v1087, %v1089
    %v1091 = vadd.f32 %v1087, %v1090
    %vm1092 = vweird.f32 %v1024
    %vm1093 = vweird.f32 %v1087
    %vm1094 = vmor %vm1092, %vm1093
    %v1095 = vsel %vm1094, %v1087, %v1091
    %v1096 = vand.u32 2147483647, %v1024
    %vm1097 = vcmp.eq.f32.partialorder %v1096, 8.507059e+37
    %v1098 = vand.u32 %v1024, 2147483648
    %v1099 = vor.u32 1.1754944e-38, %v1098
    %v1100 = vsel %vm1097, %v1099, %v1095
    %v1101 = vrcp.pop %v1027
    %v1102 = vmul.f32 %v1027, %v1101
    %v1103 = vsub.f32 1.0, %v1102
    %v1104 = vmul.f32 %v1101, %v1103
    %v1105 = vadd.f32 %v1101, %v1104
    %vm1106 = vweird.f32 %v1027
    %vm1107 = vweird.f32 %v1101
    %vm1108 = vmor %vm1106, %vm1107
    %v1109 = vsel %vm1108, %v1101, %v1105
    %v1110 = vand.u32 2147483647, %v1027
    %vm1111 = vcmp.eq.f32.partialorder %v1110, 8.507059e+37
    %v1112 = vand.u32 %v1027, 2147483648
    %v1113 = vor.u32 1.1754944e-38, %v1112
    %v1114 = vsel %vm1111, %v1113, %v1109
    %v1115 = vrcp.pop %v1030
    %v1116 = vmul.f32 %v1030, %v1115
    %v1117 = vsub.f32 1.0, %v1116
    %v1118 = vmul.f32 %v1115, %v1117
    %v1119 = vadd.f32 %v1115, %v1118
    %vm1120 = vweird.f32 %v1030
    %vm1121 = vweird.f32 %v1115
    %vm1122 = vmor %vm1120, %vm1121
    %v1123 = vsel %vm1122, %v1115, %v1119
    %v1124 = vand.u32 2147483647, %v1030
    %vm1125 = vcmp.eq.f32.partialorder %v1124, 8.507059e+37
    %v1126 = vand.u32 %v1030, 2147483648
    %v1127 = vor.u32 1.1754944e-38, %v1126
    %v1128 = vsel %vm1125, %v1127, %v1123
    %v1129 = vrcp.pop %v1033
    %v1130 = vmul.f32 %v1033, %v1129
    %v1131 = vsub.f32 1.0, %v1130
    %v1132 = vmul.f32 %v1129, %v1131
    %v1133 = vadd.f32 %v1129, %v1132
    %vm1134 = vweird.f32 %v1033
    %vm1135 = vweird.f32 %v1129
    %vm1136 = vmor %vm1134, %vm1135
    %v1137 = vsel %vm1136, %v1129, %v1133
    %v1138 = vand.u32 2147483647, %v1033
    %vm1139 = vcmp.eq.f32.partialorder %v1138, 8.507059e+37
    %v1140 = vand.u32 %v1033, 2147483648
    %v1141 = vor.u32 1.1754944e-38, %v1140
    %v1142 = vsel %vm1139, %v1141, %v1137
    %v1143 = vmul.f32 %v1076, %v1100
    %v1144 = vmul.f32 %v1079, %v1114
    %v1145 = vmul.f32 %v1082, %v1128
    %v1146 = vmul.f32 %v1085, %v1142
    %1151 = vrot.lane.b32.xlu0 %v1143, 24
    %v1152 = vpop.permute.xlu0 %1151
    %1153 = vrot.lane.b32.xlu0 %v1144, 24
    %v1154 = vpop.permute.xlu0 %1153
    %1155 = vrot.lane.b32.xlu0 %v1145, 24
    %v1156 = vpop.permute.xlu0 %1155
    %1157 = vrot.lane.b32.xlu0 %v1146, 24
    %v1158 = vpop.permute.xlu0 %1157
    %vm1163 = vcmask 261312
    %1164 = vst.msk [vmem:[#allocation2] sm:$0xff] %vm1163, %v1152
    %1165 = vst.msk [vmem:[#allocation2 + $0x8] sm:$0xff] %vm1163, %v1154
    %1166 = vst.msk [vmem:[#allocation2 + $0x10] sm:$0xff] %vm1163, %v1156
    %1167 = vst.msk [vmem:[#allocation2 + $0x18] sm:$0xff] %vm1163, %v1158
    %v1168 = vld [vmem:[#allocation2] sm:$0xff]
    %v1169 = vld [vmem:[#allocation2 + $0x8] sm:$0xff]
    %v1170 = vld [vmem:[#allocation2 + $0x10] sm:$0xff]
    %v1171 = vld [vmem:[#allocation2 + $0x18] sm:$0xff]
    %v1172 = vld [vmem:[%s1] sm:$0xff]
    %v1173 = vld [vmem:[%s1 + $0x28] sm:$0xff]
    %v1174 = vld [vmem:[%s1 + $0x50] sm:$0xff]
    %v1175 = vld [vmem:[%s1 + $0x78] sm:$0xff]
    %v1176 = vld [vmem:[%s3 + $0x1] sm:$0x1]
    %v1178 = vperm.slane %v1176, 0
    %1183 = vrot.lane.b32.xlu0 %v1172, 32
    %v1184 = vpop.permute.xlu0 %1183
    %1185 = vrot.lane.b32.xlu0 %v1173, 32
    %v1186 = vpop.permute.xlu0 %1185
    %1187 = vrot.lane.b32.xlu0 %v1174, 32
    %v1188 = vpop.permute.xlu0 %1187
    %1189 = vrot.lane.b32.xlu0 %v1175, 32
    %v1190 = vpop.permute.xlu0 %1189
    %1195 = vrot.lane.b32.xlu0 %v1178, 96
    %v1196 = vpop.permute.xlu0 %1195
    %v1199 = vsel %vm23, %v1168, 0
    %v1202 = vsel %vm23, %v1169, 0
    %v1205 = vsel %vm23, %v1170, 0
    %v1208 = vsel %vm23, %v1171, 0
    %1210 = vmatpush.msra.mxu0 0.0
    %1211 = vmatpush.msra.mxu0 0.0
    %1212 = vmatpush.msra.mxu0 0.0
    %1213 = vmatpush.msra.mxu0 0.0
    %1214 = vmatpush.msra.mxu0 0.0
    %1215 = vmatpush.msra.mxu0 0.0
    %1216 = vmatpush.msra.mxu0 0.0
    %1217 = vmatpush.msra.mxu0 0.0
    %1218 = vmatpush.msra.mxu0 0.0
    %1219 = vmatpush.msra.mxu0 0.0
    %1220 = vmatpush.msra.mxu0 0.0
    %1221 = vmatpush.msra.mxu0 0.0
    %1222 = vmatpush.msra.mxu0 %v1190
    %1223 = vmatpush.msra.mxu0 %v1188
    %1224 = vmatpush.msra.mxu0 %v1186
    %1225 = vmatpush.msra.mxu0 %v1184
    %1226 = vmatmul.f32.gmra.mxu0 %v1199
    %v1227 = vpop.f32.mrf.mxu0
    %v1228 = vadd.f32 %v1196, %v1227
    %1229 = vmatmul.f32.gmra.mxu0 %v1202
    %v1230 = vpop.f32.mrf.mxu0
    %v1231 = vadd.f32 %v1196, %v1230
    %1232 = vmatmul.f32.gmra.mxu0 %v1205
    %v1233 = vpop.f32.mrf.mxu0
    %v1234 = vadd.f32 %v1196, %v1233
    %1235 = vmatmul.f32.gmra.mxu0 %v1208
    %v1236 = vpop.f32.mrf.mxu0
    %v1237 = vadd.f32 %v1196, %v1236
    %1238 = vdwg.mxu0
    %v1239 = vld [vmem:[%s1 + $0x8] sm:$0xff]
    %v1240 = vld [vmem:[%s1 + $0x30] sm:$0xff]
    %v1241 = vld [vmem:[%s1 + $0x58] sm:$0xff]
    %v1242 = vld [vmem:[%s1 + $0x80] sm:$0xff]
    %v1243 = vld [vmem:[%s1 + $0x10] sm:$0xff]
    %v1244 = vld [vmem:[%s1 + $0x38] sm:$0xff]
    %v1245 = vld [vmem:[%s1 + $0x60] sm:$0xff]
    %v1246 = vld [vmem:[%s1 + $0x88] sm:$0xff]
    %1251 = vrot.lane.b32.xlu0 %v1239, 64
    %v1252 = vpop.permute.xlu0 %1251
    %1253 = vrot.lane.b32.xlu0 %v1240, 64
    %v1254 = vpop.permute.xlu0 %1253
    %1255 = vrot.lane.b32.xlu0 %v1241, 64
    %v1256 = vpop.permute.xlu0 %1255
    %1257 = vrot.lane.b32.xlu0 %v1242, 64
    %v1258 = vpop.permute.xlu0 %1257
    %v1264 = vsel %vm23, %v1228, 0
    %v1267 = vsel %vm23, %v1231, 0
    %v1270 = vsel %vm23, %v1234, 0
    %v1273 = vsel %vm23, %v1237, 0
    %1275 = vmatpush.msra.mxu0 0.0
    %1276 = vmatpush.msra.mxu0 0.0
    %1277 = vmatpush.msra.mxu0 0.0
    %1278 = vmatpush.msra.mxu0 0.0
    %1279 = vmatpush.msra.mxu0 0.0
    %1280 = vmatpush.msra.mxu0 0.0
    %1281 = vmatpush.msra.mxu0 0.0
    %1282 = vmatpush.msra.mxu0 0.0
    %1283 = vmatpush.msra.mxu0 0.0
    %1284 = vmatpush.msra.mxu0 0.0
    %1285 = vmatpush.msra.mxu0 0.0
    %1286 = vmatpush.msra.mxu0 0.0
    %1287 = vmatpush.msra.mxu0 %v1258
    %1288 = vmatpush.msra.mxu0 %v1256
    %1289 = vmatpush.msra.mxu0 %v1254
    %1290 = vmatpush.msra.mxu0 %v1252
    %1291 = vmatmul.f32.gmra.mxu0 %v1264
    %v1292 = vpop.f32.mrf.mxu0
    %v1293 = vadd.f32 0.0, %v1292
    %1294 = vmatmul.f32.gmra.mxu0 %v1267
    %v1295 = vpop.f32.mrf.mxu0
    %v1296 = vadd.f32 0.0, %v1295
    %1297 = vmatmul.f32.gmra.mxu0 %v1270
    %v1298 = vpop.f32.mrf.mxu0
    %v1299 = vadd.f32 0.0, %v1298
    %1300 = vmatmul.f32.gmra.mxu0 %v1273
    %v1301 = vpop.f32.mrf.mxu0
    %v1302 = vadd.f32 0.0, %v1301
    %1303 = vdwg.mxu0
    %v1305 = vsel %vm23, %v19, 0
    %v1308 = vsel %vm23, %v20, 0
    %v1311 = vsel %vm23, %v21, 0
    %v1314 = vsel %vm23, %v22, 0
    %1316 = vmatpush.msra.mxu0 0.0
    %1317 = vmatpush.msra.mxu0 0.0
    %1318 = vmatpush.msra.mxu0 0.0
    %1319 = vmatpush.msra.mxu0 0.0
    %1320 = vmatpush.msra.mxu0 0.0
    %1321 = vmatpush.msra.mxu0 0.0
    %1322 = vmatpush.msra.mxu0 0.0
    %1323 = vmatpush.msra.mxu0 0.0
    %1324 = vmatpush.msra.mxu0 0.0
    %1325 = vmatpush.msra.mxu0 0.0
    %1326 = vmatpush.msra.mxu0 0.0
    %1327 = vmatpush.msra.mxu0 0.0
    %1328 = vmatpush.msra.mxu0 %v1242
    %1329 = vmatpush.msra.mxu0 %v1241
    %1330 = vmatpush.msra.mxu0 %v1240
    %1331 = vmatpush.msra.mxu0 %v1239
    %1332 = vmatmul.f32.gmra.mxu0 %v1305
    %v1333 = vpop.f32.mrf.mxu0
    %v1334 = vadd.f32 %v1293, %v1333
    %1335 = vmatmul.f32.gmra.mxu0 %v1308
    %v1336 = vpop.f32.mrf.mxu0
    %v1337 = vadd.f32 %v1296, %v1336
    %1338 = vmatmul.f32.gmra.mxu0 %v1311
    %v1339 = vpop.f32.mrf.mxu0
    %v1340 = vadd.f32 %v1299, %v1339
    %1341 = vmatmul.f32.gmra.mxu0 %v1314
    %v1342 = vpop.f32.mrf.mxu0
    %v1343 = vadd.f32 %v1302, %v1342
    %1344 = vdwg.mxu0
    %1345 = vrot.lane.b32.xlu0 %v1178, 64
    %v1346 = vpop.permute.xlu0 %1345
    %v1348 = vadd.f32 %v1334, %v1346
    %v1349 = vadd.f32 %v1337, %v1346
    %v1350 = vadd.f32 %v1340, %v1346
    %v1351 = vadd.f32 %v1343, %v1346
    %v1352 = vxor.u32 %v1348, 2147483648
    %v1353 = vxor.u32 %v1349, 2147483648
    %v1354 = vxor.u32 %v1350, 2147483648
    %v1355 = vxor.u32 %v1351, 2147483648
    %v1356 = vmul.f32 %v1352, 1.442695
    %v1357 = vpow.pop %v1356
    %v1358 = vmul.f32 %v1353, 1.442695
    %v1359 = vpow.pop %v1358
    %v1360 = vmul.f32 %v1354, 1.442695
    %v1361 = vpow.pop %v1360
    %v1362 = vmul.f32 %v1355, 1.442695
    %v1363 = vpow.pop %v1362
    %v1364 = vadd.f32 %v1357, 1.0
    %v1365 = vadd.f32 %v1359, 1.0
    %v1366 = vadd.f32 %v1361, 1.0
    %v1367 = vadd.f32 %v1363, 1.0
    %v1368 = vrcp.pop %v1364
    %v1369 = vmul.f32 %v1364, %v1368
    %v1370 = vsub.f32 1.0, %v1369
    %v1371 = vmul.f32 %v1368, %v1370
    %v1372 = vadd.f32 %v1368, %v1371
    %vm1373 = vweird.f32 %v1364
    %vm1374 = vweird.f32 %v1368
    %vm1375 = vmor %vm1373, %vm1374
    %v1376 = vsel %vm1375, %v1368, %v1372
    %v1377 = vand.u32 2147483647, %v1364
    %vm1378 = vcmp.eq.f32.partialorder %v1377, 8.507059e+37
    %v1379 = vand.u32 %v1364, 2147483648
    %v1380 = vor.u32 1.1754944e-38, %v1379
    %v1381 = vsel %vm1378, %v1380, %v1376
    %v1382 = vmul.f32 1.0, %v1381
    %v1383 = vrcp.pop %v1365
    %v1384 = vmul.f32 %v1365, %v1383
    %v1385 = vsub.f32 1.0, %v1384
    %v1386 = vmul.f32 %v1383, %v1385
    %v1387 = vadd.f32 %v1383, %v1386
    %vm1388 = vweird.f32 %v1365
    %vm1389 = vweird.f32 %v1383
    %vm1390 = vmor %vm1388, %vm1389
    %v1391 = vsel %vm1390, %v1383, %v1387
    %v1392 = vand.u32 2147483647, %v1365
    %vm1393 = vcmp.eq.f32.partialorder %v1392, 8.507059e+37
    %v1394 = vand.u32 %v1365, 2147483648
    %v1395 = vor.u32 1.1754944e-38, %v1394
    %v1396 = vsel %vm1393, %v1395, %v1391
    %v1397 = vmul.f32 1.0, %v1396
    %v1398 = vrcp.pop %v1366
    %v1399 = vmul.f32 %v1366, %v1398
    %v1400 = vsub.f32 1.0, %v1399
    %v1401 = vmul.f32 %v1398, %v1400
    %v1402 = vadd.f32 %v1398, %v1401
    %vm1403 = vweird.f32 %v1366
    %vm1404 = vweird.f32 %v1398
    %vm1405 = vmor %vm1403, %vm1404
    %v1406 = vsel %vm1405, %v1398, %v1402
    %v1407 = vand.u32 2147483647, %v1366
    %vm1408 = vcmp.eq.f32.partialorder %v1407, 8.507059e+37
    %v1409 = vand.u32 %v1366, 2147483648
    %v1410 = vor.u32 1.1754944e-38, %v1409
    %v1411 = vsel %vm1408, %v1410, %v1406
    %v1412 = vmul.f32 1.0, %v1411
    %v1413 = vrcp.pop %v1367
    %v1414 = vmul.f32 %v1367, %v1413
    %v1415 = vsub.f32 1.0, %v1414
    %v1416 = vmul.f32 %v1413, %v1415
    %v1417 = vadd.f32 %v1413, %v1416
    %vm1418 = vweird.f32 %v1367
    %vm1419 = vweird.f32 %v1413
    %vm1420 = vmor %vm1418, %vm1419
    %v1421 = vsel %vm1420, %v1413, %v1417
    %v1422 = vand.u32 2147483647, %v1367
    %vm1423 = vcmp.eq.f32.partialorder %v1422, 8.507059e+37
    %v1424 = vand.u32 %v1367, 2147483648
    %v1425 = vor.u32 1.1754944e-38, %v1424
    %v1426 = vsel %vm1423, %v1425, %v1421
    %v1427 = vmul.f32 1.0, %v1426
    %v1428 = vmul.f32 %v1382, %v19
    %v1429 = vmul.f32 %v1397, %v20
    %v1430 = vmul.f32 %v1412, %v21
    %v1431 = vmul.f32 %v1427, %v22
    %1436 = vrot.lane.b32.xlu0 %v1243, 96
    %v1437 = vpop.permute.xlu0 %1436
    %1438 = vrot.lane.b32.xlu0 %v1244, 96
    %v1439 = vpop.permute.xlu0 %1438
    %1440 = vrot.lane.b32.xlu0 %v1245, 96
    %v1441 = vpop.permute.xlu0 %1440
    %1442 = vrot.lane.b32.xlu0 %v1246, 96
    %v1443 = vpop.permute.xlu0 %1442
    %1448 = vmatpush.msra.mxu0 0.0
    %1449 = vmatpush.msra.mxu0 0.0
    %1450 = vmatpush.msra.mxu0 0.0
    %1451 = vmatpush.msra.mxu0 0.0
    %1452 = vmatpush.msra.mxu0 0.0
    %1453 = vmatpush.msra.mxu0 0.0
    %1454 = vmatpush.msra.mxu0 0.0
    %1455 = vmatpush.msra.mxu0 0.0
    %1456 = vmatpush.msra.mxu0 0.0
    %1457 = vmatpush.msra.mxu0 0.0
    %1458 = vmatpush.msra.mxu0 0.0
    %1459 = vmatpush.msra.mxu0 0.0
    %1460 = vmatpush.msra.mxu0 %v1443
    %1461 = vmatpush.msra.mxu0 %v1441
    %1462 = vmatpush.msra.mxu0 %v1439
    %1463 = vmatpush.msra.mxu0 %v1437
    %1464 = vmatmul.f32.gmra.mxu0 %v1264
    %v1465 = vpop.f32.mrf.mxu0
    %v1466 = vadd.f32 0.0, %v1465
    %1467 = vmatmul.f32.gmra.mxu0 %v1267
    %v1468 = vpop.f32.mrf.mxu0
    %v1469 = vadd.f32 0.0, %v1468
    %1470 = vmatmul.f32.gmra.mxu0 %v1270
    %v1471 = vpop.f32.mrf.mxu0
    %v1472 = vadd.f32 0.0, %v1471
    %1473 = vmatmul.f32.gmra.mxu0 %v1273
    %v1474 = vpop.f32.mrf.mxu0
    %v1475 = vadd.f32 0.0, %v1474
    %1476 = vdwg.mxu0
    %v1478 = vsel %vm23, %v1428, 0
    %v1481 = vsel %vm23, %v1429, 0
    %v1484 = vsel %vm23, %v1430, 0
    %v1487 = vsel %vm23, %v1431, 0
    %1489 = vmatpush.msra.mxu0 0.0
    %1490 = vmatpush.msra.mxu0 0.0
    %1491 = vmatpush.msra.mxu0 0.0
    %1492 = vmatpush.msra.mxu0 0.0
    %1493 = vmatpush.msra.mxu0 0.0
    %1494 = vmatpush.msra.mxu0 0.0
    %1495 = vmatpush.msra.mxu0 0.0
    %1496 = vmatpush.msra.mxu0 0.0
    %1497 = vmatpush.msra.mxu0 0.0
    %1498 = vmatpush.msra.mxu0 0.0
    %1499 = vmatpush.msra.mxu0 0.0
    %1500 = vmatpush.msra.mxu0 0.0
    %1501 = vmatpush.msra.mxu0 %v1246
    %1502 = vmatpush.msra.mxu0 %v1245
    %1503 = vmatpush.msra.mxu0 %v1244
    %1504 = vmatpush.msra.mxu0 %v1243
    %1505 = vmatmul.f32.gmra.mxu0 %v1478
    %v1506 = vpop.f32.mrf.mxu0
    %v1507 = vadd.f32 %v1466, %v1506
    %1508 = vmatmul.f32.gmra.mxu0 %v1481
    %v1509 = vpop.f32.mrf.mxu0
    %v1510 = vadd.f32 %v1469, %v1509
    %1511 = vmatmul.f32.gmra.mxu0 %v1484
    %v1512 = vpop.f32.mrf.mxu0
    %v1513 = vadd.f32 %v1472, %v1512
    %1514 = vmatmul.f32.gmra.mxu0 %v1487
    %v1515 = vpop.f32.mrf.mxu0
    %v1516 = vadd.f32 %v1475, %v1515
    %1517 = vdwg.mxu0
    %v1518 = vtanh.pop %v1507
    %v1519 = vtanh.pop %v1510
    %v1520 = vtanh.pop %v1513
    %v1521 = vtanh.pop %v1516
    %v1522 = vsub.f32 1.0, %v1382
    %v1523 = vsub.f32 1.0, %v1397
    %v1524 = vsub.f32 1.0, %v1412
    %v1525 = vsub.f32 1.0, %v1427
    %1526 = vrot.lane.b32.xlu0 %v19, 32
    %v1527 = vpop.permute.xlu0 %1526
    %1528 = vrot.lane.b32.xlu0 %v20, 32
    %v1529 = vpop.permute.xlu0 %1528
    %1530 = vrot.lane.b32.xlu0 %v21, 32
    %v1531 = vpop.permute.xlu0 %1530
    %1532 = vrot.lane.b32.xlu0 %v22, 32
    %v1533 = vpop.permute.xlu0 %1532
    %v1538 = vmul.f32 %v1522, %v1527
    %v1539 = vmul.f32 %v1523, %v1529
    %v1540 = vmul.f32 %v1524, %v1531
    %v1541 = vmul.f32 %v1525, %v1533
    %1546 = vrot.lane.b32.xlu0 %v1518, 32
    %v1547 = vpop.permute.xlu0 %1546
    %1548 = vrot.lane.b32.xlu0 %v1519, 32
    %v1549 = vpop.permute.xlu0 %1548
    %1550 = vrot.lane.b32.xlu0 %v1520, 32
    %v1551 = vpop.permute.xlu0 %1550
    %1552 = vrot.lane.b32.xlu0 %v1521, 32
    %v1553 = vpop.permute.xlu0 %1552
    %v1558 = vmul.f32 %v1382, %v1547
    %v1559 = vmul.f32 %v1397, %v1549
    %v1560 = vmul.f32 %v1412, %v1551
    %v1561 = vmul.f32 %v1427, %v1553
    %v1562 = vadd.f32 %v1538, %v1558
    %v1563 = vadd.f32 %v1539, %v1559
    %v1564 = vadd.f32 %v1540, %v1560
    %v1565 = vadd.f32 %v1541, %v1561
    %1570 = vrot.lane.b32.xlu0 %v1562, 96
    %v1571 = vpop.permute.xlu0 %1570
    %1572 = vrot.lane.b32.xlu0 %v1563, 96
    %v1573 = vpop.permute.xlu0 %1572
    %1574 = vrot.lane.b32.xlu0 %v1564, 96
    %v1575 = vpop.permute.xlu0 %1574
    %1576 = vrot.lane.b32.xlu0 %v1565, 96
    %v1577 = vpop.permute.xlu0 %1576
    %v1582 = vsel %vm23, %v1571, 0.0
    %1583 = vadd.xlane.f32.xlu0 %v1582
    %v1584 = vpop.xlane.xlu0 %1583
    %v1585 = vsel %vm23, %v1573, 0.0
    %1586 = vadd.xlane.f32.xlu0 %v1585
    %v1587 = vpop.xlane.xlu0 %1586
    %v1588 = vsel %vm23, %v1575, 0.0
    %1589 = vadd.xlane.f32.xlu0 %v1588
    %v1590 = vpop.xlane.xlu0 %1589
    %v1591 = vsel %vm23, %v1577, 0.0
    %1592 = vadd.xlane.f32.xlu0 %v1591
    %v1593 = vpop.xlane.xlu0 %1592
    %v1594 = vmul.f32 %v1584, %v42
    %v1595 = vmul.f32 %v1587, %v42
    %v1596 = vmul.f32 %v1590, %v42
    %v1597 = vmul.f32 %v1593, %v42
    %v1598 = vsub.f32 %v1562, %v1594
    %v1599 = vsub.f32 %v1563, %v1595
    %v1600 = vsub.f32 %v1564, %v1596
    %v1601 = vsub.f32 %v1565, %v1597
    %v1602 = vmul.f32 %v1598, %v1598
    %v1603 = vmul.f32 %v1599, %v1599
    %v1604 = vmul.f32 %v1600, %v1600
    %v1605 = vmul.f32 %v1601, %v1601
    %1610 = vrot.lane.b32.xlu0 %v1602, 96
    %v1611 = vpop.permute.xlu0 %1610
    %1612 = vrot.lane.b32.xlu0 %v1603, 96
    %v1613 = vpop.permute.xlu0 %1612
    %1614 = vrot.lane.b32.xlu0 %v1604, 96
    %v1615 = vpop.permute.xlu0 %1614
    %1616 = vrot.lane.b32.xlu0 %v1605, 96
    %v1617 = vpop.permute.xlu0 %1616
    %v1622 = vsel %vm23, %v1611, 0.0
    %1623 = vadd.xlane.f32.xlu0 %v1622
    %v1624 = vpop.xlane.xlu0 %1623
    %v1625 = vsel %vm23, %v1613, 0.0
    %1626 = vadd.xlane.f32.xlu0 %v1625
    %v1627 = vpop.xlane.xlu0 %1626
    %v1628 = vsel %vm23, %v1615, 0.0
    %1629 = vadd.xlane.f32.xlu0 %v1628
    %v1630 = vpop.xlane.xlu0 %1629
    %v1631 = vsel %vm23, %v1617, 0.0
    %1632 = vadd.xlane.f32.xlu0 %v1631
    %v1633 = vpop.xlane.xlu0 %1632
    %v1634 = vmul.f32 %v1624, %v42
    %v1635 = vmul.f32 %v1627, %v42
    %v1636 = vmul.f32 %v1630, %v42
    %v1637 = vmul.f32 %v1633, %v42
    %v1638 = vadd.f32 %v1634, 1e-05
    %v1639 = vadd.f32 %v1635, 1e-05
    %v1640 = vadd.f32 %v1636, 1e-05
    %v1641 = vadd.f32 %v1637, 1e-05
    %v1642 = vrsqrt.pop %v1638
    %v1643 = vmul.f32 %v1642, %v1638
    %v1644 = vmul.f32 %v1643, %v1642
    %v1645 = vmul.f32 0.5, %v1644
    %v1646 = vsub.f32 1.5, %v1645
    %v1647 = vmul.f32 %v1642, %v1646
    %vm1648 = vweird.f32 %v1638
    %vm1649 = vweird.f32 %v1642
    %vm1650 = vmor %vm1648, %vm1649
    %v1651 = vsel %vm1650, %v1642, %v1647
    %v1652 = vrsqrt.pop %v1639
    %v1653 = vmul.f32 %v1652, %v1639
    %v1654 = vmul.f32 %v1653, %v1652
    %v1655 = vmul.f32 0.5, %v1654
    %v1656 = vsub.f32 1.5, %v1655
    %v1657 = vmul.f32 %v1652, %v1656
    %vm1658 = vweird.f32 %v1639
    %vm1659 = vweird.f32 %v1652
    %vm1660 = vmor %vm1658, %vm1659
    %v1661 = vsel %vm1660, %v1652, %v1657
    %v1662 = vrsqrt.pop %v1640
    %v1663 = vmul.f32 %v1662, %v1640
    %v1664 = vmul.f32 %v1663, %v1662
    %v1665 = vmul.f32 0.5, %v1664
    %v1666 = vsub.f32 1.5, %v1665
    %v1667 = vmul.f32 %v1662, %v1666
    %vm1668 = vweird.f32 %v1640
    %vm1669 = vweird.f32 %v1662
    %vm1670 = vmor %vm1668, %vm1669
    %v1671 = vsel %vm1670, %v1662, %v1667
    %v1672 = vrsqrt.pop %v1641
    %v1673 = vmul.f32 %v1672, %v1641
    %v1674 = vmul.f32 %v1673, %v1672
    %v1675 = vmul.f32 0.5, %v1674
    %v1676 = vsub.f32 1.5, %v1675
    %v1677 = vmul.f32 %v1672, %v1676
    %vm1678 = vweird.f32 %v1641
    %vm1679 = vweird.f32 %v1672
    %vm1680 = vmor %vm1678, %vm1679
    %v1681 = vsel %vm1680, %v1672, %v1677
    %v1682 = vmul.f32 %v1598, %v1651
    %v1683 = vmul.f32 %v1599, %v1661
    %v1684 = vmul.f32 %v1600, %v1671
    %v1685 = vmul.f32 %v1601, %v1681
    %1686 = vrot.lane.b32.xlu0 %v120, 32
    %v1687 = vpop.permute.xlu0 %1686
    %v1689 = vmul.f32 %v1682, %v1687
    %v1690 = vmul.f32 %v1683, %v1687
    %v1691 = vmul.f32 %v1684, %v1687
    %v1692 = vmul.f32 %v1685, %v1687
    %v1693 = vadd.f32 %v1689, %v120
    %v1694 = vadd.f32 %v1690, %v120
    %v1695 = vadd.f32 %v1691, %v120
    %v1696 = vadd.f32 %v1692, %v120
    %v1697 = vld [vmem:[%s3 + $0x2] sm:$0x1]
    %v1699 = vperm.slane %v1697, 0
    %1705 = vrot.lane.b32.xlu0 %v1693, 96
    %v1706 = vpop.permute.xlu0 %1705
    %1707 = vrot.lane.b32.xlu0 %v1694, 96
    %v1708 = vpop.permute.xlu0 %1707
    %1709 = vrot.lane.b32.xlu0 %v1695, 96
    %v1710 = vpop.permute.xlu0 %1709
    %1711 = vrot.lane.b32.xlu0 %v1696, 96
    %v1712 = vpop.permute.xlu0 %1711
    %1713 = vrot.lane.b32.xlu0 %v1243, 64
    %v1714 = vpop.permute.xlu0 %1713
    %1715 = vrot.lane.b32.xlu0 %v1244, 64
    %v1716 = vpop.permute.xlu0 %1715
    %1717 = vrot.lane.b32.xlu0 %v1245, 64
    %v1718 = vpop.permute.xlu0 %1717
    %1719 = vrot.lane.b32.xlu0 %v1246, 64
    %v1720 = vpop.permute.xlu0 %1719
    %v1725 = vsel %vm23, %v1706, 0
    %v1727 = vsel %vm23, %v1708, 0
    %v1729 = vsel %vm23, %v1710, 0
    %v1731 = vsel %vm23, %v1712, 0
    %1733 = vmatpush.msra.mxu0 0.0
    %1734 = vmatpush.msra.mxu0 0.0
    %1735 = vmatpush.msra.mxu0 0.0
    %1736 = vmatpush.msra.mxu0 0.0
    %1737 = vmatpush.msra.mxu0 0.0
    %1738 = vmatpush.msra.mxu0 0.0
    %1739 = vmatpush.msra.mxu0 0.0
    %1740 = vmatpush.msra.mxu0 0.0
    %1741 = vmatpush.msra.mxu0 0.0
    %1742 = vmatpush.msra.mxu0 0.0
    %1743 = vmatpush.msra.mxu0 0.0
    %1744 = vmatpush.msra.mxu0 0.0
    %1745 = vmatpush.msra.mxu0 %v1720
    %1746 = vmatpush.msra.mxu0 %v1718
    %1747 = vmatpush.msra.mxu0 %v1716
    %1748 = vmatpush.msra.mxu0 %v1714
    %1749 = vmatmul.f32.gmra.mxu0 %v1725
    %v1750 = vpop.f32.mrf.mxu0
    %v1751 = vadd.f32 %v1699, %v1750
    %1752 = vmatmul.f32.gmra.mxu0 %v1727
    %v1753 = vpop.f32.mrf.mxu0
    %v1754 = vadd.f32 %v1699, %v1753
    %1755 = vmatmul.f32.gmra.mxu0 %v1729
    %v1756 = vpop.f32.mrf.mxu0
    %v1757 = vadd.f32 %v1699, %v1756
    %1758 = vmatmul.f32.gmra.mxu0 %v1731
    %v1759 = vpop.f32.mrf.mxu0
    %v1760 = vadd.f32 %v1699, %v1759
    %1761 = vdwg.mxu0
    %v1762 = vmax.f32 %v1751, 0.0
    %v1763 = vmax.f32 %v1754, 0.0
    %v1764 = vmax.f32 %v1757, 0.0
    %v1765 = vmax.f32 %v1760, 0.0
    %v1766 = vld [vmem:[%s2] sm:$0xff]
    %v1767 = vld [vmem:[%s2 + $0x8] sm:$0xff]
    %v1768 = vld [vmem:[%s2 + $0x10] sm:$0xff]
    %v1769 = vld [vmem:[%s2 + $0x18] sm:$0xff]
    %v1770 = vld [vmem:[%s2 + $0x20] sm:$0xff]
    %v1771 = vld [vmem:[%s2 + $0x28] sm:$0xff]
    %v1772 = vld [vmem:[%s2 + $0x30] sm:$0xff]
    %v1773 = vld [vmem:[%s2 + $0x38] sm:$0xff]
    %1774 = vrot.lane.b32.xlu0 %v1699, 64
    %v1775 = vpop.permute.xlu0 %1774
    %v1778 = vsel %vm145, %v1762, 0
    %v1781 = vsel %vm145, %v1763, 0
    %v1784 = vsel %vm145, %v1764, 0
    %v1787 = vsel %vm145, %v1765, 0
    %1789 = vmatpush.msra.mxu0 0.0
    %1790 = vmatpush.msra.mxu0 0.0
    %1791 = vmatpush.msra.mxu0 0.0
    %1792 = vmatpush.msra.mxu0 0.0
    %1793 = vmatpush.msra.mxu0 0.0
    %1794 = vmatpush.msra.mxu0 0.0
    %1795 = vmatpush.msra.mxu0 0.0
    %1796 = vmatpush.msra.mxu0 0.0
    %1797 = vmatpush.msra.mxu0 %v1773
    %1798 = vmatpush.msra.mxu0 %v1772
    %1799 = vmatpush.msra.mxu0 %v1771
    %1800 = vmatpush.msra.mxu0 %v1770
    %1801 = vmatpush.msra.mxu0 %v1769
    %1802 = vmatpush.msra.mxu0 %v1768
    %1803 = vmatpush.msra.mxu0 %v1767
    %1804 = vmatpush.msra.mxu0 %v1766
    %1805 = vmatmul.f32.gmra.mxu0 %v1778
    %v1806 = vpop.f32.mrf.mxu0
    %v1807 = vadd.f32 %v1775, %v1806
    %1808 = vmatmul.f32.gmra.mxu0 %v1781
    %v1809 = vpop.f32.mrf.mxu0
    %v1810 = vadd.f32 %v1775, %v1809
    %1811 = vmatmul.f32.gmra.mxu0 %v1784
    %v1812 = vpop.f32.mrf.mxu0
    %v1813 = vadd.f32 %v1775, %v1812
    %1814 = vmatmul.f32.gmra.mxu0 %v1787
    %v1815 = vpop.f32.mrf.mxu0
    %v1816 = vadd.f32 %v1775, %v1815
    %1817 = vdwg.mxu0
    %v1818 = vld [vmem:[%s1 + $0x18] sm:$0xff]
    %v1819 = vld [vmem:[%s1 + $0x40] sm:$0xff]
    %v1820 = vld [vmem:[%s1 + $0x68] sm:$0xff]
    %v1821 = vld [vmem:[%s1 + $0x90] sm:$0xff]
    %v1822 = vld [vmem:[%s3 + $0x2] sm:$0x3]
    %v1823 = vld [vmem:[%s1 + $0x20] sm:$0xff]
    %v1824 = vld [vmem:[%s1 + $0x48] sm:$0xff]
    %v1825 = vld [vmem:[%s1 + $0x70] sm:$0xff]
    %v1826 = vld [vmem:[%s1 + $0x98] sm:$0xff]
    %1831 = vrot.lane.b32.xlu0 %v1818, 64
    %v1832 = vpop.permute.xlu0 %1831
    %1833 = vrot.lane.b32.xlu0 %v1819, 64
    %v1834 = vpop.permute.xlu0 %1833
    %1835 = vrot.lane.b32.xlu0 %v1820, 64
    %v1836 = vpop.permute.xlu0 %1835
    %1837 = vrot.lane.b32.xlu0 %v1821, 64
    %v1838 = vpop.permute.xlu0 %1837
    %v1844 = vsel %vm23, %v1807, 0
    %v1847 = vsel %vm23, %v1810, 0
    %v1850 = vsel %vm23, %v1813, 0
    %v1853 = vsel %vm23, %v1816, 0
    %1855 = vmatpush.msra.mxu0 0.0
    %1856 = vmatpush.msra.mxu0 0.0
    %1857 = vmatpush.msra.mxu0 0.0
    %1858 = vmatpush.msra.mxu0 0.0
    %1859 = vmatpush.msra.mxu0 0.0
    %1860 = vmatpush.msra.mxu0 0.0
    %1861 = vmatpush.msra.mxu0 0.0
    %1862 = vmatpush.msra.mxu0 0.0
    %1863 = vmatpush.msra.mxu0 0.0
    %1864 = vmatpush.msra.mxu0 0.0
    %1865 = vmatpush.msra.mxu0 0.0
    %1866 = vmatpush.msra.mxu0 0.0
    %1867 = vmatpush.msra.mxu0 %v1838
    %1868 = vmatpush.msra.mxu0 %v1836
    %1869 = vmatpush.msra.mxu0 %v1834
    %1870 = vmatpush.msra.mxu0 %v1832
    %1871 = vmatmul.f32.gmra.mxu0 %v1844
    %v1872 = vpop.f32.mrf.mxu0
    %v1873 = vadd.f32 0.0, %v1872
    %1874 = vmatmul.f32.gmra.mxu0 %v1847
    %v1875 = vpop.f32.mrf.mxu0
    %v1876 = vadd.f32 0.0, %v1875
    %1877 = vmatmul.f32.gmra.mxu0 %v1850
    %v1878 = vpop.f32.mrf.mxu0
    %v1879 = vadd.f32 0.0, %v1878
    %1880 = vmatmul.f32.gmra.mxu0 %v1853
    %v1881 = vpop.f32.mrf.mxu0
    %v1882 = vadd.f32 0.0, %v1881
    %1883 = vdwg.mxu0
    %v1884 = vsel %vm23, %v1571, 0
    %v1886 = vsel %vm23, %v1573, 0
    %v1888 = vsel %vm23, %v1575, 0
    %v1890 = vsel %vm23, %v1577, 0
    %1892 = vmatpush.msra.mxu0 0.0
    %1893 = vmatpush.msra.mxu0 0.0
    %1894 = vmatpush.msra.mxu0 0.0
    %1895 = vmatpush.msra.mxu0 0.0
    %1896 = vmatpush.msra.mxu0 0.0
    %1897 = vmatpush.msra.mxu0 0.0
    %1898 = vmatpush.msra.mxu0 0.0
    %1899 = vmatpush.msra.mxu0 0.0
    %1900 = vmatpush.msra.mxu0 0.0
    %1901 = vmatpush.msra.mxu0 0.0
    %1902 = vmatpush.msra.mxu0 0.0
    %1903 = vmatpush.msra.mxu0 0.0
    %1904 = vmatpush.msra.mxu0 %v1821
    %1905 = vmatpush.msra.mxu0 %v1820
    %1906 = vmatpush.msra.mxu0 %v1819
    %1907 = vmatpush.msra.mxu0 %v1818
    %1908 = vmatmul.f32.gmra.mxu0 %v1884
    %v1909 = vpop.f32.mrf.mxu0
    %v1910 = vadd.f32 %v1873, %v1909
    %1911 = vmatmul.f32.gmra.mxu0 %v1886
    %v1912 = vpop.f32.mrf.mxu0
    %v1913 = vadd.f32 %v1876, %v1912
    %1914 = vmatmul.f32.gmra.mxu0 %v1888
    %v1915 = vpop.f32.mrf.mxu0
    %v1916 = vadd.f32 %v1879, %v1915
    %1917 = vmatmul.f32.gmra.mxu0 %v1890
    %v1918 = vpop.f32.mrf.mxu0
    %v1919 = vadd.f32 %v1882, %v1918
    %1920 = vdwg.mxu0
    %v1922 = vperm.slane %v1822, 0
    %v1923 = vperm.slane %v1822, 1
    %1924 = vrot.lane.b32.xlu0 %v1922, 32
    %v1925 = vpop.permute.xlu0 %1924
    %1926 = vrot.lane.b32.xlu0 %v1923, 32
    %v1927 = vpop.permute.xlu0 %1926
    %v1928 = vsel %vm23, %v1925, %v1927
    %v1930 = vadd.f32 %v1910, %v1928
    %v1931 = vadd.f32 %v1913, %v1928
    %v1932 = vadd.f32 %v1916, %v1928
    %v1933 = vadd.f32 %v1919, %v1928
    %v1934 = vxor.u32 %v1930, 2147483648
    %v1935 = vxor.u32 %v1931, 2147483648
    %v1936 = vxor.u32 %v1932, 2147483648
    %v1937 = vxor.u32 %v1933, 2147483648
    %v1938 = vmul.f32 %v1934, 1.442695
    %v1939 = vpow.pop %v1938
    %v1940 = vmul.f32 %v1935, 1.442695
    %v1941 = vpow.pop %v1940
    %v1942 = vmul.f32 %v1936, 1.442695
    %v1943 = vpow.pop %v1942
    %v1944 = vmul.f32 %v1937, 1.442695
    %v1945 = vpow.pop %v1944
    %v1946 = vadd.f32 %v1939, 1.0
    %v1947 = vadd.f32 %v1941, 1.0
    %v1948 = vadd.f32 %v1943, 1.0
    %v1949 = vadd.f32 %v1945, 1.0
    %v1950 = vrcp.pop %v1946
    %v1951 = vmul.f32 %v1946, %v1950
    %v1952 = vsub.f32 1.0, %v1951
    %v1953 = vmul.f32 %v1950, %v1952
    %v1954 = vadd.f32 %v1950, %v1953
    %vm1955 = vweird.f32 %v1946
    %vm1956 = vweird.f32 %v1950
    %vm1957 = vmor %vm1955, %vm1956
    %v1958 = vsel %vm1957, %v1950, %v1954
    %v1959 = vand.u32 2147483647, %v1946
    %vm1960 = vcmp.eq.f32.partialorder %v1959, 8.507059e+37
    %v1961 = vand.u32 %v1946, 2147483648
    %v1962 = vor.u32 1.1754944e-38, %v1961
    %v1963 = vsel %vm1960, %v1962, %v1958
    %v1964 = vmul.f32 1.0, %v1963
    %v1965 = vrcp.pop %v1947
    %v1966 = vmul.f32 %v1947, %v1965
    %v1967 = vsub.f32 1.0, %v1966
    %v1968 = vmul.f32 %v1965, %v1967
    %v1969 = vadd.f32 %v1965, %v1968
    %vm1970 = vweird.f32 %v1947
    %vm1971 = vweird.f32 %v1965
    %vm1972 = vmor %vm1970, %vm1971
    %v1973 = vsel %vm1972, %v1965, %v1969
    %v1974 = vand.u32 2147483647, %v1947
    %vm1975 = vcmp.eq.f32.partialorder %v1974, 8.507059e+37
    %v1976 = vand.u32 %v1947, 2147483648
    %v1977 = vor.u32 1.1754944e-38, %v1976
    %v1978 = vsel %vm1975, %v1977, %v1973
    %v1979 = vmul.f32 1.0, %v1978
    %v1980 = vrcp.pop %v1948
    %v1981 = vmul.f32 %v1948, %v1980
    %v1982 = vsub.f32 1.0, %v1981
    %v1983 = vmul.f32 %v1980, %v1982
    %v1984 = vadd.f32 %v1980, %v1983
    %vm1985 = vweird.f32 %v1948
    %vm1986 = vweird.f32 %v1980
    %vm1987 = vmor %vm1985, %vm1986
    %v1988 = vsel %vm1987, %v1980, %v1984
    %v1989 = vand.u32 2147483647, %v1948
    %vm1990 = vcmp.eq.f32.partialorder %v1989, 8.507059e+37
    %v1991 = vand.u32 %v1948, 2147483648
    %v1992 = vor.u32 1.1754944e-38, %v1991
    %v1993 = vsel %vm1990, %v1992, %v1988
    %v1994 = vmul.f32 1.0, %v1993
    %v1995 = vrcp.pop %v1949
    %v1996 = vmul.f32 %v1949, %v1995
    %v1997 = vsub.f32 1.0, %v1996
    %v1998 = vmul.f32 %v1995, %v1997
    %v1999 = vadd.f32 %v1995, %v1998
    %vm2000 = vweird.f32 %v1949
    %vm2001 = vweird.f32 %v1995
    %vm2002 = vmor %vm2000, %vm2001
    %v2003 = vsel %vm2002, %v1995, %v1999
    %v2004 = vand.u32 2147483647, %v1949
    %vm2005 = vcmp.eq.f32.partialorder %v2004, 8.507059e+37
    %v2006 = vand.u32 %v1949, 2147483648
    %v2007 = vor.u32 1.1754944e-38, %v2006
    %v2008 = vsel %vm2005, %v2007, %v2003
    %v2009 = vmul.f32 1.0, %v2008
    %v2010 = vmul.f32 %v1964, %v1571
    %v2011 = vmul.f32 %v1979, %v1573
    %v2012 = vmul.f32 %v1994, %v1575
    %v2013 = vmul.f32 %v2009, %v1577
    %2018 = vrot.lane.b32.xlu0 %v1823, 96
    %v2019 = vpop.permute.xlu0 %2018
    %2020 = vrot.lane.b32.xlu0 %v1824, 96
    %v2021 = vpop.permute.xlu0 %2020
    %2022 = vrot.lane.b32.xlu0 %v1825, 96
    %v2023 = vpop.permute.xlu0 %2022
    %2024 = vrot.lane.b32.xlu0 %v1826, 96
    %v2025 = vpop.permute.xlu0 %2024
    %2030 = vmatpush.msra.mxu0 0.0
    %2031 = vmatpush.msra.mxu0 0.0
    %2032 = vmatpush.msra.mxu0 0.0
    %2033 = vmatpush.msra.mxu0 0.0
    %2034 = vmatpush.msra.mxu0 0.0
    %2035 = vmatpush.msra.mxu0 0.0
    %2036 = vmatpush.msra.mxu0 0.0
    %2037 = vmatpush.msra.mxu0 0.0
    %2038 = vmatpush.msra.mxu0 0.0
    %2039 = vmatpush.msra.mxu0 0.0
    %2040 = vmatpush.msra.mxu0 0.0
    %2041 = vmatpush.msra.mxu0 0.0
    %2042 = vmatpush.msra.mxu0 %v2025
    %2043 = vmatpush.msra.mxu0 %v2023
    %2044 = vmatpush.msra.mxu0 %v2021
    %2045 = vmatpush.msra.mxu0 %v2019
    %2046 = vmatmul.f32.gmra.mxu0 %v1844
    %v2047 = vpop.f32.mrf.mxu0
    %v2048 = vadd.f32 0.0, %v2047
    %2049 = vmatmul.f32.gmra.mxu0 %v1847
    %v2050 = vpop.f32.mrf.mxu0
    %v2051 = vadd.f32 0.0, %v2050
    %2052 = vmatmul.f32.gmra.mxu0 %v1850
    %v2053 = vpop.f32.mrf.mxu0
    %v2054 = vadd.f32 0.0, %v2053
    %2055 = vmatmul.f32.gmra.mxu0 %v1853
    %v2056 = vpop.f32.mrf.mxu0
    %v2057 = vadd.f32 0.0, %v2056
    %2058 = vdwg.mxu0
    %v2060 = vsel %vm23, %v2010, 0
    %v2063 = vsel %vm23, %v2011, 0
    %v2066 = vsel %vm23, %v2012, 0
    %v2069 = vsel %vm23, %v2013, 0
    %2071 = vmatpush.msra.mxu0 0.0
    %2072 = vmatpush.msra.mxu0 0.0
    %2073 = vmatpush.msra.mxu0 0.0
    %2074 = vmatpush.msra.mxu0 0.0
    %2075 = vmatpush.msra.mxu0 0.0
    %2076 = vmatpush.msra.mxu0 0.0
    %2077 = vmatpush.msra.mxu0 0.0
    %2078 = vmatpush.msra.mxu0 0.0
    %2079 = vmatpush.msra.mxu0 0.0
    %2080 = vmatpush.msra.mxu0 0.0
    %2081 = vmatpush.msra.mxu0 0.0
    %2082 = vmatpush.msra.mxu0 0.0
    %2083 = vmatpush.msra.mxu0 %v1826
    %2084 = vmatpush.msra.mxu0 %v1825
    %2085 = vmatpush.msra.mxu0 %v1824
    %2086 = vmatpush.msra.mxu0 %v1823
    %2087 = vmatmul.f32.gmra.mxu0 %v2060
    %v2088 = vpop.f32.mrf.mxu0
    %v2089 = vadd.f32 %v2048, %v2088
    %2090 = vmatmul.f32.gmra.mxu0 %v2063
    %v2091 = vpop.f32.mrf.mxu0
    %v2092 = vadd.f32 %v2051, %v2091
    %2093 = vmatmul.f32.gmra.mxu0 %v2066
    %v2094 = vpop.f32.mrf.mxu0
    %v2095 = vadd.f32 %v2054, %v2094
    %2096 = vmatmul.f32.gmra.mxu0 %v2069
    %v2097 = vpop.f32.mrf.mxu0
    %v2098 = vadd.f32 %v2057, %v2097
    %2099 = vdwg.mxu0
    %v2100 = vtanh.pop %v2089
    %v2101 = vtanh.pop %v2092
    %v2102 = vtanh.pop %v2095
    %v2103 = vtanh.pop %v2098
    %v2104 = vsub.f32 1.0, %v1964
    %v2105 = vsub.f32 1.0, %v1979
    %v2106 = vsub.f32 1.0, %v1994
    %v2107 = vsub.f32 1.0, %v2009
    %v2108 = vmul.f32 %v2104, %v1562
    %v2109 = vmul.f32 %v2105, %v1563
    %v2110 = vmul.f32 %v2106, %v1564
    %v2111 = vmul.f32 %v2107, %v1565
    %2116 = vrot.lane.b32.xlu0 %v2100, 32
    %v2117 = vpop.permute.xlu0 %2116
    %2118 = vrot.lane.b32.xlu0 %v2101, 32
    %v2119 = vpop.permute.xlu0 %2118
    %2120 = vrot.lane.b32.xlu0 %v2102, 32
    %v2121 = vpop.permute.xlu0 %2120
    %2122 = vrot.lane.b32.xlu0 %v2103, 32
    %v2123 = vpop.permute.xlu0 %2122
    %v2128 = vmul.f32 %v1964, %v2117
    %v2129 = vmul.f32 %v1979, %v2119
    %v2130 = vmul.f32 %v1994, %v2121
    %v2131 = vmul.f32 %v2009, %v2123
    %v2132 = vadd.f32 %v2108, %v2128
    %v2133 = vadd.f32 %v2109, %v2129
    %v2134 = vadd.f32 %v2110, %v2130
    %v2135 = vadd.f32 %v2111, %v2131
    %2140 = vrot.lane.b32.xlu0 %v2132, 96
    %v2141 = vpop.permute.xlu0 %2140
    %2142 = vrot.lane.b32.xlu0 %v2133, 96
    %v2143 = vpop.permute.xlu0 %2142
    %2144 = vrot.lane.b32.xlu0 %v2134, 96
    %v2145 = vpop.permute.xlu0 %2144
    %2146 = vrot.lane.b32.xlu0 %v2135, 96
    %v2147 = vpop.permute.xlu0 %2146
    %2152 = vst.msk [vmem:[#allocation3] sm:$0xff] %vm23, %v2141
    %2153 = vst.msk [vmem:[#allocation3 + $0x8] sm:$0xff] %vm23, %v2143
    %2154 = vst.msk [vmem:[#allocation3 + $0x10] sm:$0xff] %vm23, %v2145
    %2155 = vst.msk [vmem:[#allocation3 + $0x18] sm:$0xff] %vm23, %v2147
    // Predicated region
    $region18: #{gated_transformer_block.1} parent=1 // pred_check
      _
    $region19: #{gated_transformer_block.1} parent=1 // pred_check_branch
      %2157 = sbr.rel (0) target = $region21
    $region20: #{gated_transformer_block.1} parent=1 // pred_region
      %2159 = vsyncadd [#allocation4], 0
      %s2160 = sshll.u32 [#allocation3], 4
      %s2161 = int_to_ptr.vmem [resolvable:$true] %s2160
      %s2162 = sshll.u32 %s4, 4
      %s2163 = int_to_ptr.hbm [resolvable:$true] %s2162
      %2168 = dma.vmem_to_hbm [thread:$0]  %s2161, 512, %s2163, [#allocation4], 128, 128, 8
    $region21: #{gated_transformer_block.1} parent=1 // pred_fallthru
      _
    // Predicated region
    $region22: #{gated_transformer_block.1} parent=1 // pred_check
      _
    $region23: #{gated_transformer_block.1} parent=1 // pred_check_branch
      %2170 = sbr.rel (0) target = $region25
    $region24: #{gated_transformer_block.1} parent=1 // pred_region
      %2172 = dma.done [#allocation4], 512
    $region25: #{gated_transformer_block.1} parent=1 // pred_fallthru
      _
    %2173 = vsyncpa [#allocation4], 1

</llo_original>
